<compile_context>
chip_gen: v7x
topology: tpu7x:2x2x1
jax: 0.10.0
libtpu: 0.0.40
codegen_flags: <defaults>
</compile_context>

<pallas_src>
import jax
import jax.numpy as jnp
from jax.experimental import pallas as pl
from jax.experimental.pallas import tpu as pltpu

IN_DIM = 28 * 28   # 784
HID = 64
OUT_DIM = 10
PAD_OUT = 128      # lane-dense output slab (one full vreg lane width)
NEG_PAD = -1e30    # "minus infinity" bias for padded logit lanes (do NOT cast slab to fp16)
TILE_B_DEFAULT = 512   # v5e/v6e sweet spot; use 1024-2048 on v7x (keep >=2 grid steps)


def mlp_kernel(x_ref, w1_ref, b1_ref, w2_ref, b2_ref, w3_ref, b3_ref,
               w4_ref, b4_ref, o_ref):
    # x arrives as f32 straight from HBM; cast to bf16 in VMEM (removes the wrapper-side
    # cast+pad HBM pass) and run bf16 MXU matmuls with f32 accumulation / f32 epilogue.
    x = x_ref[...].astype(jnp.bfloat16)                       # (TILE_B, IN_DIM)

    # fc1 + ReLU
    h = jnp.dot(x, w1_ref[...], preferred_element_type=jnp.float32) + b1_ref[...]
    h = jnp.maximum(h, 0.0).astype(jnp.bfloat16)
    # fc2 + ReLU
    h = jnp.dot(h, w2_ref[...], preferred_element_type=jnp.float32) + b2_ref[...]
    h = jnp.maximum(h, 0.0).astype(jnp.bfloat16)
    # fc3 + ReLU
    h = jnp.dot(h, w3_ref[...], preferred_element_type=jnp.float32) + b3_ref[...]
    h = jnp.maximum(h, 0.0).astype(jnp.bfloat16)
    # fc4: output padded to 128 lanes; lanes 10..127 carry bias NEG_PAD (acts like -inf)
    logits = jnp.dot(h, w4_ref[...], preferred_element_type=jnp.float32) + b4_ref[...]

    # log_softmax over the feature axis; padded lanes contribute exp(-huge) == 0.
    m = jnp.max(logits, axis=1, keepdims=True)
    shifted = logits - m
    lse = jnp.log(jnp.sum(jnp.exp(shifted), axis=1, keepdims=True))
    o_ref[...] = (shifted - lse).astype(o_ref.dtype)


def net_forward(x, params, *, tile_b=TILE_B_DEFAULT, out_dtype=jnp.float32,
                return_padded_slab=False):
    """x: (B, 784) float32. params: dict of f32 weights/biases.

    Returns (B, 10) log-probs (or the padded (B, 128) slab if return_padded_slab=True,
    which avoids one extra HBM pass over the output).
    """
    B = x.shape[0]

    # Tile selection: single full-extent block for small batches, otherwise a fixed
    # 8-aligned batch tile with a pl.cdiv grid (no batch padding — the last partial
    # block's out-of-bounds rows are simply discarded on writeback).
    if B <= tile_b:
        tile = B                       # block == full array dim: always legal
    else:
        tile = max(8, (tile_b // 8) * 8)   # sublane-aligned tile
    grid = (pl.cdiv(B, tile),)

    # Weights in bf16 (tiny, one-time cast); biases stay f32 for the f32 epilogue.
    w1 = params["w1"].astype(jnp.bfloat16)
    w2 = params["w2"].astype(jnp.bfloat16)
    w3 = params["w3"].astype(jnp.bfloat16)
    b1, b2, b3 = params["b1"], params["b2"], params["b3"]
    # Pad fc4 to a lane-dense 128-wide output: zero weight columns, NEG_PAD bias columns.
    w4 = jnp.pad(params["w4"], ((0, 0), (0, PAD_OUT - OUT_DIM))).astype(jnp.bfloat16)
    b4 = jnp.pad(params["b4"], ((0, 0), (0, PAD_OUT - OUT_DIM)),
                 constant_values=NEG_PAD)

    batch_spec = lambda shape: pl.BlockSpec(shape, lambda i: (i, 0))   # tiled over batch
    const_spec = lambda shape: pl.BlockSpec(shape, lambda i: (0, 0))   # VMEM-resident

    out = pl.pallas_call(
        mlp_kernel,
        out_shape=jax.ShapeDtypeStruct((B, PAD_OUT), out_dtype),
        grid=grid,
        in_specs=[
            batch_spec((tile, IN_DIM)),
            const_spec((IN_DIM, HID)),  const_spec((1, HID)),
            const_spec((HID, HID)),     const_spec((1, HID)),
            const_spec((HID, HID)),     const_spec((1, HID)),
            const_spec((HID, PAD_OUT)), const_spec((1, PAD_OUT)),
        ],
        out_specs=batch_spec((tile, PAD_OUT)),
        compiler_params=pltpu.CompilerParams(
            dimension_semantics=("parallel",),   # shard batch tiles across TCs on v7x
            vmem_limit_bytes=32 << 20,           # sized for tile_b up to ~2048
        ),
    )(x, w1, b1, w2, b2, w3, b3, w4, b4)

    if return_padded_slab:
        return out                     # consumer reads lanes [:10]; no extra HBM pass
    return out[:, :OUT_DIM]


def init_params(key):
    """Deterministic init mimicking nn.Linear's uniform(-1/sqrt(fan_in), 1/sqrt(fan_in))."""
    def linear(key, fan_in, fan_out):
        kw, kb = jax.random.split(key)
        bound = 1.0 / jnp.sqrt(fan_in)
        # stored as (in, out): transpose of PyTorch's (out, in) weight
        w = jax.random.uniform(kw, (fan_in, fan_out), jnp.float32, -bound, bound)
        b = jax.random.uniform(kb, (1, fan_out), jnp.float32, -bound, bound)
        return w, b

    k1, k2, k3, k4 = jax.random.split(key, 4)
    w1, b1 = linear(k1, IN_DIM, HID)
    w2, b2 = linear(k2, HID, HID)
    w3, b3 = linear(k3, HID, HID)
    w4, b4 = linear(k4, HID, OUT_DIM)
    return dict(w1=w1, b1=b1, w2=w2, b2=b2, w3=w3, b3=b3, w4=w4, b4=b4)


def reference_forward(x, p):
    """Pure-JAX reference with the same bf16 quantization / f32 accumulation."""
    q = lambda a: a.astype(jnp.bfloat16).astype(jnp.float32)
    h = jnp.maximum(q(x) @ q(p["w1"]) + p["b1"], 0.0)
    h = jnp.maximum(q(h) @ q(p["w2"]) + p["b2"], 0.0)
    h = jnp.maximum(q(h) @ q(p["w3"]) + p["b3"], 0.0)
    logits = q(h) @ q(p["w4"]) + p["b4"]
    return jax.nn.log_softmax(logits, axis=1)


if __name__ == "__main__":
    key = jax.random.PRNGKey(0)
    kx, kp = jax.random.split(key)

    B = 200
    x = jax.random.normal(kx, (B, IN_DIM), dtype=jnp.float32)
    params = init_params(kp)
    ref = reference_forward(x, params)

    # Path 1: default tile (B <= tile_b -> single full-extent batch block).
    out = jax.block_until_ready(net_forward(x, params))
    assert out.shape == (B, OUT_DIM)
    assert bool(jnp.all(jnp.isfinite(out))), "non-finite log-probs"
    assert jnp.allclose(out, ref, atol=2e-2, rtol=2e-2), "mismatch vs JAX reference"

    # Path 2: multi-step grid with a ragged last tile (exercises the pl.cdiv grid
    # + discarded out-of-bounds writeback path used for large batches).
    out2 = jax.block_until_ready(net_forward(x, params, tile_b=64))
    assert out2.shape == (B, OUT_DIM)
    assert bool(jnp.all(jnp.isfinite(out2))), "non-finite log-probs (ragged grid)"
    assert jnp.allclose(out2, ref, atol=2e-2, rtol=2e-2), "ragged-grid mismatch vs reference"

    print("KERNEL_OK")
</pallas_src>

<mosaic_0001>
module attributes {stable_mosaic.version = 11 : i64} {
  func.func @mlp_kernel(%arg0: i32, %arg1: memref<200x784xf32, #tpu.memory_space<vmem>>, %arg2: memref<784x64xbf16, #tpu.memory_space<vmem>>, %arg3: memref<1x64xf32, #tpu.memory_space<vmem>>, %arg4: memref<64x64xbf16, #tpu.memory_space<vmem>>, %arg5: memref<1x64xf32, #tpu.memory_space<vmem>>, %arg6: memref<64x64xbf16, #tpu.memory_space<vmem>>, %arg7: memref<1x64xf32, #tpu.memory_space<vmem>>, %arg8: memref<64x128xbf16, #tpu.memory_space<vmem>>, %arg9: memref<1x128xf32, #tpu.memory_space<vmem>>, %arg10: memref<200x128xf32, #tpu.memory_space<vmem>>) attributes {dimension_semantics = [#tpu.dimension_semantics<parallel>], iteration_bounds = array<i64: 1>, scalar_prefetch = 0 : i64, scratch_operands = 0 : i64, tpu.core_type = #tpu.core_type<tc>, window_params = [{transform_indices = @transform_0, window_bounds = array<i64: 200, 784>}, {pipeline_mode = #tpu.pipeline_mode<synchronous>, transform_indices = @transform_1, window_bounds = array<i64: 784, 64>}, {pipeline_mode = #tpu.pipeline_mode<synchronous>, transform_indices = @transform_2, window_bounds = array<i64: 1, 64>}, {pipeline_mode = #tpu.pipeline_mode<synchronous>, transform_indices = @transform_3, window_bounds = array<i64: 64, 64>}, {pipeline_mode = #tpu.pipeline_mode<synchronous>, transform_indices = @transform_4, window_bounds = array<i64: 1, 64>}, {pipeline_mode = #tpu.pipeline_mode<synchronous>, transform_indices = @transform_5, window_bounds = array<i64: 64, 64>}, {pipeline_mode = #tpu.pipeline_mode<synchronous>, transform_indices = @transform_6, window_bounds = array<i64: 1, 64>}, {pipeline_mode = #tpu.pipeline_mode<synchronous>, transform_indices = @transform_7, window_bounds = array<i64: 64, 128>}, {pipeline_mode = #tpu.pipeline_mode<synchronous>, transform_indices = @transform_8, window_bounds = array<i64: 1, 128>}, {transform_indices = @transform_9, window_bounds = array<i64: 200, 128>}]} {
    %c0 = arith.constant 0 : index
    %c0_0 = arith.constant 0 : index
    %0 = vector.load %arg1[%c0, %c0_0] : memref<200x784xf32, #tpu.memory_space<vmem>>, vector<200x784xf32>
    %1 = arith.truncf %0 : vector<200x784xf32> to vector<200x784xbf16>
    %c0_1 = arith.constant 0 : index
    %c0_2 = arith.constant 0 : index
    %2 = vector.load %arg2[%c0_1, %c0_2] : memref<784x64xbf16, #tpu.memory_space<vmem>>, vector<784x64xbf16>
    %cst = arith.constant dense<0.000000e+00> : vector<200x64xf32>
    %3 = tpu.matmul %1, %2, %cst {dimension_numbers = #tpu.dot_dimension_numbers<[1], [0], [0], [1], [0, 0, 1, 1], [], []>} : vector<200x784xbf16>, vector<784x64xbf16>, vector<200x64xf32> -> vector<200x64xf32>
    %c0_3 = arith.constant 0 : index
    %c0_4 = arith.constant 0 : index
    %4 = vector.load %arg3[%c0_3, %c0_4] : memref<1x64xf32, #tpu.memory_space<vmem>>, vector<1x64xf32>
    %5 = vector.broadcast %4 : vector<1x64xf32> to vector<200x64xf32>
    %6 = arith.addf %3, %5 : vector<200x64xf32>
    %cst_5 = arith.constant 0.000000e+00 : f32
    %7 = vector.broadcast %cst_5 : f32 to vector<200x64xf32>
    %8 = arith.maximumf %6, %7 : vector<200x64xf32>
    %9 = arith.truncf %8 : vector<200x64xf32> to vector<200x64xbf16>
    %c0_6 = arith.constant 0 : index
    %c0_7 = arith.constant 0 : index
    %10 = vector.load %arg4[%c0_6, %c0_7] : memref<64x64xbf16, #tpu.memory_space<vmem>>, vector<64x64xbf16>
    %cst_8 = arith.constant dense<0.000000e+00> : vector<200x64xf32>
    %11 = tpu.matmul %9, %10, %cst_8 {dimension_numbers = #tpu.dot_dimension_numbers<[1], [0], [0], [1], [0, 0, 1, 1], [], []>} : vector<200x64xbf16>, vector<64x64xbf16>, vector<200x64xf32> -> vector<200x64xf32>
    %c0_9 = arith.constant 0 : index
    %c0_10 = arith.constant 0 : index
    %12 = vector.load %arg5[%c0_9, %c0_10] : memref<1x64xf32, #tpu.memory_space<vmem>>, vector<1x64xf32>
    %13 = vector.broadcast %12 : vector<1x64xf32> to vector<200x64xf32>
    %14 = arith.addf %11, %13 : vector<200x64xf32>
    %cst_11 = arith.constant 0.000000e+00 : f32
    %15 = vector.broadcast %cst_11 : f32 to vector<200x64xf32>
    %16 = arith.maximumf %14, %15 : vector<200x64xf32>
    %17 = arith.truncf %16 : vector<200x64xf32> to vector<200x64xbf16>
    %c0_12 = arith.constant 0 : index
    %c0_13 = arith.constant 0 : index
    %18 = vector.load %arg6[%c0_12, %c0_13] : memref<64x64xbf16, #tpu.memory_space<vmem>>, vector<64x64xbf16>
    %cst_14 = arith.constant dense<0.000000e+00> : vector<200x64xf32>
    %19 = tpu.matmul %17, %18, %cst_14 {dimension_numbers = #tpu.dot_dimension_numbers<[1], [0], [0], [1], [0, 0, 1, 1], [], []>} : vector<200x64xbf16>, vector<64x64xbf16>, vector<200x64xf32> -> vector<200x64xf32>
    %c0_15 = arith.constant 0 : index
    %c0_16 = arith.constant 0 : index
    %20 = vector.load %arg7[%c0_15, %c0_16] : memref<1x64xf32, #tpu.memory_space<vmem>>, vector<1x64xf32>
    %21 = vector.broadcast %20 : vector<1x64xf32> to vector<200x64xf32>
    %22 = arith.addf %19, %21 : vector<200x64xf32>
    %cst_17 = arith.constant 0.000000e+00 : f32
    %23 = vector.broadcast %cst_17 : f32 to vector<200x64xf32>
    %24 = arith.maximumf %22, %23 : vector<200x64xf32>
    %25 = arith.truncf %24 : vector<200x64xf32> to vector<200x64xbf16>
    %c0_18 = arith.constant 0 : index
    %c0_19 = arith.constant 0 : index
    %26 = vector.load %arg8[%c0_18, %c0_19] : memref<64x128xbf16, #tpu.memory_space<vmem>>, vector<64x128xbf16>
    %cst_20 = arith.constant dense<0.000000e+00> : vector<200x128xf32>
    %27 = tpu.matmul %25, %26, %cst_20 {dimension_numbers = #tpu.dot_dimension_numbers<[1], [0], [0], [1], [0, 0, 1, 1], [], []>} : vector<200x64xbf16>, vector<64x128xbf16>, vector<200x128xf32> -> vector<200x128xf32>
    %c0_21 = arith.constant 0 : index
    %c0_22 = arith.constant 0 : index
    %28 = vector.load %arg9[%c0_21, %c0_22] : memref<1x128xf32, #tpu.memory_space<vmem>>, vector<1x128xf32>
    %29 = vector.broadcast %28 : vector<1x128xf32> to vector<200x128xf32>
    %30 = arith.addf %27, %29 : vector<200x128xf32>
    %cst_23 = arith.constant dense<0xFF800000> : vector<200xf32>
    %31 = vector.multi_reduction <maximumf>, %30, %cst_23 [1] : vector<200x128xf32> to vector<200xf32>
    %32 = vector.shape_cast %31 : vector<200xf32> to vector<200x1xf32>
    %33 = vector.broadcast %32 : vector<200x1xf32> to vector<200x128xf32>
    %34 = arith.subf %30, %33 : vector<200x128xf32>
    %35 = math.exp %34 : vector<200x128xf32>
    %cst_24 = arith.constant dense<0.000000e+00> : vector<200xf32>
    %36 = vector.multi_reduction <add>, %35, %cst_24 [1] : vector<200x128xf32> to vector<200xf32>
    %37 = vector.shape_cast %36 : vector<200xf32> to vector<200x1xf32>
    %38 = math.log %37 : vector<200x1xf32>
    %39 = vector.broadcast %38 : vector<200x1xf32> to vector<200x128xf32>
    %40 = arith.subf %34, %39 : vector<200x128xf32>
    %c0_25 = arith.constant 0 : index
    %c0_26 = arith.constant 0 : index
    %41 = vector.load %arg10[%c0_25, %c0_26] : memref<200x128xf32, #tpu.memory_space<vmem>>, vector<200x128xf32>
    tpu.vector_store %arg10[%c0_25, %c0_26], %40 {strides = array<i32>} : memref<200x128xf32, #tpu.memory_space<vmem>>, vector<200x128xf32>,
    return
  }
  func.func @transform_0(%arg0: i32) -> (i32, i32) {
    %c0_i32 = arith.constant 0 : i32
    %c0_i32_0 = arith.constant 0 : i32
    return %arg0, %c0_i32 : i32, i32
  }
  func.func @transform_1(%arg0: i32) -> (i32, i32) {
    %c0_i32 = arith.constant 0 : i32
    %c0_i32_0 = arith.constant 0 : i32
    %c0_i32_1 = arith.constant 0 : i32
    return %c0_i32, %c0_i32_0 : i32, i32
  }
  func.func @transform_2(%arg0: i32) -> (i32, i32) {
    %c0_i32 = arith.constant 0 : i32
    %c0_i32_0 = arith.constant 0 : i32
    %c0_i32_1 = arith.constant 0 : i32
    return %c0_i32, %c0_i32_0 : i32, i32
  }
  func.func @transform_3(%arg0: i32) -> (i32, i32) {
    %c0_i32 = arith.constant 0 : i32
    %c0_i32_0 = arith.constant 0 : i32
    %c0_i32_1 = arith.constant 0 : i32
    return %c0_i32, %c0_i32_0 : i32, i32
  }
  func.func @transform_4(%arg0: i32) -> (i32, i32) {
    %c0_i32 = arith.constant 0 : i32
    %c0_i32_0 = arith.constant 0 : i32
    %c0_i32_1 = arith.constant 0 : i32
    return %c0_i32, %c0_i32_0 : i32, i32
  }
  func.func @transform_5(%arg0: i32) -> (i32, i32) {
    %c0_i32 = arith.constant 0 : i32
    %c0_i32_0 = arith.constant 0 : i32
    %c0_i32_1 = arith.constant 0 : i32
    return %c0_i32, %c0_i32_0 : i32, i32
  }
  func.func @transform_6(%arg0: i32) -> (i32, i32) {
    %c0_i32 = arith.constant 0 : i32
    %c0_i32_0 = arith.constant 0 : i32
    %c0_i32_1 = arith.constant 0 : i32
    return %c0_i32, %c0_i32_0 : i32, i32
  }
  func.func @transform_7(%arg0: i32) -> (i32, i32) {
    %c0_i32 = arith.constant 0 : i32
    %c0_i32_0 = arith.constant 0 : i32
    %c0_i32_1 = arith.constant 0 : i32
    return %c0_i32, %c0_i32_0 : i32, i32
  }
  func.func @transform_8(%arg0: i32) -> (i32, i32) {
    %c0_i32 = arith.constant 0 : i32
    %c0_i32_0 = arith.constant 0 : i32
    %c0_i32_1 = arith.constant 0 : i32
    return %c0_i32, %c0_i32_0 : i32, i32
  }
  func.func @transform_9(%arg0: i32) -> (i32, i32) {
    %c0_i32 = arith.constant 0 : i32
    %c0_i32_0 = arith.constant 0 : i32
    return %arg0, %c0_i32 : i32, i32
  }
}

</mosaic_0001>

<llo_original>
// kernel: tpu_custom_call.1
$region0: #{tpu_custom_call.1}
  #allocation0 [shape = 'u32[]', space=smem, size = 0x4, offset = 0x4, fixed_abs, tag = 'smem constant byte address 0x4 - core index']
  #allocation1 [shape = 'u32[144,128]{1,0:T(1,128)}', space=vmem, size = 0x12000, scoped, tag = 'internal scratch']
  %s0 = inlined_call_operand.hbm [shape: f32[200,784], index: 0, kind: input, shape index: {}]
  %s1 = inlined_call_operand.vmem [shape: bf16[784,64], index: 1, kind: input, shape index: {}]
  %s2 = inlined_call_operand.vmem [shape: f32[1,64], index: 2, kind: input, shape index: {}]
  %s3 = inlined_call_operand.vmem [shape: bf16[64,64], index: 3, kind: input, shape index: {}]
  %s4 = inlined_call_operand.vmem [shape: f32[1,64], index: 4, kind: input, shape index: {}]
  %s5 = inlined_call_operand.vmem [shape: bf16[64,64], index: 5, kind: input, shape index: {}]
  %s6 = inlined_call_operand.vmem [shape: f32[1,64], index: 6, kind: input, shape index: {}]
  %s7 = inlined_call_operand.vmem [shape: bf16[64,128], index: 7, kind: input, shape index: {}]
  %s8 = inlined_call_operand.vmem [shape: f32[1,128], index: 8, kind: input, shape index: {}]
  %s9 = inlined_call_operand.hbm [shape: f32[200,128], index: 9, kind: output, shape index: {}]
  %s10 = sld [smem:[#allocation0]]
  $region50: #{tpu_custom_call.1} parent=0
    _
  %s12 = ssub.s32 1, %s10
  %s13 = scalar_select 0, %s12, %s10
  $region1: #{tpu_custom_call.1} parent=0
    #allocation2 [shape = 'u8[716800]{0}', space=vmem, size = 0xaf000, scoped, tag = 'input window, operand 0, single buffered']
    #allocation3 [shape = 's32[1]{0}', space=sflag, size = 0x4, scoped, tag = 'scoped memory for tpu_custom_call.1']
    #allocation4 [shape = 's32[1]{0}', space=sflag, size = 0x4, scoped, tag = 'scoped memory for tpu_custom_call.1']
    #allocation5 [shape = 'u8[102400]{0}', space=vmem, size = 0x19000, scoped, tag = 'output window, operand 0, single buffered']
    %14 = vsyncpa [#allocation3], 0
    %15 = vsyncpa [#allocation4], 0
    // Predicated region
    $region2: #{tpu_custom_call.1} parent=1 // pred_check
      _
    $region3: #{tpu_custom_call.1} parent=1 // pred_check_branch
      %17 = sbr.rel (0) target = $region5
    $region4: #{tpu_custom_call.1} parent=1 // pred_region
      %s19 = ssub.s32 22400, 22400
      %20 = vsyncadd [#allocation3], %s19
      %s21 = sshll.u32 [#allocation2], 4
      %s22 = int_to_ptr.vmem [resolvable:$true] %s21
      %27 = dma.hbm_to_vmem [thread:$0]  %s0, 22400, %s22, [#allocation3], 896, 896, 56
    $region5: #{tpu_custom_call.1} parent=1 // pred_fallthru
      _
    // Predicated region
    $region6: #{tpu_custom_call.1} parent=1 // pred_check
      _
    $region7: #{tpu_custom_call.1} parent=1 // pred_check_branch
      %29 = sbr.rel (0) target = $region9
    $region8: #{tpu_custom_call.1} parent=1 // pred_region
      _
    $region9: #{tpu_custom_call.1} parent=1 // pred_fallthru
      _
    // Predicated region
    $region10: #{tpu_custom_call.1} parent=1 // pred_check
      _
    $region11: #{tpu_custom_call.1} parent=1 // pred_check_branch
      %31 = sbr.rel (0) target = $region13
    $region12: #{tpu_custom_call.1} parent=1 // pred_region
      _
    $region13: #{tpu_custom_call.1} parent=1 // pred_fallthru
      _
    // Predicated region
    $region14: #{tpu_custom_call.1} parent=1 // pred_check
      _
    $region15: #{tpu_custom_call.1} parent=1 // pred_check_branch
      %33 = sbr.rel (0) target = $region17
    $region16: #{tpu_custom_call.1} parent=1 // pred_region
      _
    $region17: #{tpu_custom_call.1} parent=1 // pred_fallthru
      _
    // Predicated region
    $region18: #{tpu_custom_call.1} parent=1 // pred_check
      _
    $region19: #{tpu_custom_call.1} parent=1 // pred_check_branch
      %35 = sbr.rel (0) target = $region21
    $region20: #{tpu_custom_call.1} parent=1 // pred_region
      _
    $region21: #{tpu_custom_call.1} parent=1 // pred_fallthru
      _
    // Predicated region
    $region22: #{tpu_custom_call.1} parent=1 // pred_check
      _
    $region23: #{tpu_custom_call.1} parent=1 // pred_check_branch
      %37 = sbr.rel (0) target = $region25
    $region24: #{tpu_custom_call.1} parent=1 // pred_region
      _
    $region25: #{tpu_custom_call.1} parent=1 // pred_fallthru
      _
    // Predicated region
    $region26: #{tpu_custom_call.1} parent=1 // pred_check
      _
    $region27: #{tpu_custom_call.1} parent=1 // pred_check_branch
      %39 = sbr.rel (0) target = $region29
    $region28: #{tpu_custom_call.1} parent=1 // pred_region
      _
    $region29: #{tpu_custom_call.1} parent=1 // pred_fallthru
      _
    // Predicated region
    $region30: #{tpu_custom_call.1} parent=1 // pred_check
      _
    $region31: #{tpu_custom_call.1} parent=1 // pred_check_branch
      %41 = sbr.rel (0) target = $region33
    $region32: #{tpu_custom_call.1} parent=1 // pred_region
      _
    $region33: #{tpu_custom_call.1} parent=1 // pred_fallthru
      _
    // Predicated region
    $region34: #{tpu_custom_call.1} parent=1 // pred_check
      _
    $region35: #{tpu_custom_call.1} parent=1 // pred_check_branch
      %43 = sbr.rel (0) target = $region37
    $region36: #{tpu_custom_call.1} parent=1 // pred_region
      _
    $region37: #{tpu_custom_call.1} parent=1 // pred_fallthru
      _
    // Predicated region
    $region38: #{tpu_custom_call.1} parent=1 // pred_check
      _
    $region39: #{tpu_custom_call.1} parent=1 // pred_check_branch
      %45 = sbr.rel (0) target = $region41
    $region40: #{tpu_custom_call.1} parent=1 // pred_region
      %46 = dma.done [#allocation3], 22400
    $region41: #{tpu_custom_call.1} parent=1 // pred_fallthru
      _
    %v48 = vld [vmem:[#allocation2] sm:$0xff]
    %v49 = vld [vmem:[#allocation2 + $0x8] sm:$0xff]
    %v50 = vld [vmem:[#allocation2 + $0x10] sm:$0xff]
    %v51 = vld [vmem:[#allocation2 + $0x18] sm:$0xff]
    %v52 = vld [vmem:[#allocation2 + $0x20] sm:$0xff]
    %v53 = vld [vmem:[#allocation2 + $0x28] sm:$0xff]
    %v54 = vld [vmem:[#allocation2 + $0x30] sm:$0xff]
    %v55 = vld [vmem:[#allocation2 + $0x38] sm:$0xff]
    %v56 = vld [vmem:[#allocation2 + $0x40] sm:$0xff]
    %v57 = vld [vmem:[#allocation2 + $0x48] sm:$0xff]
    %v58 = vld [vmem:[#allocation2 + $0x50] sm:$0xff]
    %v59 = vld [vmem:[#allocation2 + $0x58] sm:$0xff]
    %v60 = vld [vmem:[#allocation2 + $0x60] sm:$0xff]
    %v61 = vld [vmem:[#allocation2 + $0x68] sm:$0xff]
    %v62 = vld [vmem:[#allocation2 + $0x70] sm:$0xff]
    %v63 = vld [vmem:[#allocation2 + $0x78] sm:$0xff]
    %v64 = vld [vmem:[#allocation2 + $0x80] sm:$0xff]
    %v65 = vld [vmem:[#allocation2 + $0x88] sm:$0xff]
    %v66 = vld [vmem:[#allocation2 + $0x90] sm:$0xff]
    %v67 = vld [vmem:[#allocation2 + $0x98] sm:$0xff]
    %v68 = vld [vmem:[#allocation2 + $0xa0] sm:$0xff]
    %v69 = vld [vmem:[#allocation2 + $0xa8] sm:$0xff]
    %v70 = vld [vmem:[#allocation2 + $0xb0] sm:$0xff]
    %v71 = vld [vmem:[#allocation2 + $0xb8] sm:$0xff]
    %v72 = vld [vmem:[#allocation2 + $0xc0] sm:$0xff]
    %v73 = vld [vmem:[#allocation2 + $0xc8] sm:$0xff]
    %v74 = vld [vmem:[#allocation2 + $0xd0] sm:$0xff]
    %v75 = vld [vmem:[#allocation2 + $0xd8] sm:$0xff]
    %v76 = vld [vmem:[#allocation2 + $0xe0] sm:$0xff]
    %v77 = vld [vmem:[#allocation2 + $0xe8] sm:$0xff]
    %v78 = vld [vmem:[#allocation2 + $0xf0] sm:$0xff]
    %v79 = vld [vmem:[#allocation2 + $0xf8] sm:$0xff]
    %v80 = vld [vmem:[#allocation2 + $0x100] sm:$0xff]
    %v81 = vld [vmem:[#allocation2 + $0x108] sm:$0xff]
    %v82 = vld [vmem:[#allocation2 + $0x110] sm:$0xff]
    %v83 = vld [vmem:[#allocation2 + $0x118] sm:$0xff]
    %v84 = vld [vmem:[#allocation2 + $0x120] sm:$0xff]
    %v85 = vld [vmem:[#allocation2 + $0x128] sm:$0xff]
    %v86 = vld [vmem:[#allocation2 + $0x130] sm:$0xff]
    %v87 = vld [vmem:[#allocation2 + $0x138] sm:$0xff]
    %v88 = vld [vmem:[#allocation2 + $0x140] sm:$0xff]
    %v89 = vld [vmem:[#allocation2 + $0x148] sm:$0xff]
    %v90 = vld [vmem:[#allocation2 + $0x150] sm:$0xff]
    %v91 = vld [vmem:[#allocation2 + $0x158] sm:$0xff]
    %v92 = vld [vmem:[#allocation2 + $0x160] sm:$0xff]
    %v93 = vld [vmem:[#allocation2 + $0x168] sm:$0xff]
    %v94 = vld [vmem:[#allocation2 + $0x170] sm:$0xff]
    %v95 = vld [vmem:[#allocation2 + $0x178] sm:$0xff]
    %v96 = vld [vmem:[#allocation2 + $0x180] sm:$0xff]
    %v97 = vld [vmem:[#allocation2 + $0x188] sm:$0xff]
    %v98 = vld [vmem:[#allocation2 + $0x190] sm:$0xff]
    %v99 = vld [vmem:[#allocation2 + $0x198] sm:$0xff]
    %v100 = vld [vmem:[#allocation2 + $0x1a0] sm:$0xff]
    %v101 = vld [vmem:[#allocation2 + $0x1a8] sm:$0xff]
    %v102 = vld [vmem:[#allocation2 + $0x1b0] sm:$0xff]
    %v103 = vld [vmem:[#allocation2 + $0x1b8] sm:$0xff]
    %v104 = vld [vmem:[#allocation2 + $0x1c0] sm:$0xff]
    %v105 = vld [vmem:[#allocation2 + $0x1c8] sm:$0xff]
    %v106 = vld [vmem:[#allocation2 + $0x1d0] sm:$0xff]
    %v107 = vld [vmem:[#allocation2 + $0x1d8] sm:$0xff]
    %v108 = vld [vmem:[#allocation2 + $0x1e0] sm:$0xff]
    %v109 = vld [vmem:[#allocation2 + $0x1e8] sm:$0xff]
    %v110 = vld [vmem:[#allocation2 + $0x1f0] sm:$0xff]
    %v111 = vld [vmem:[#allocation2 + $0x1f8] sm:$0xff]
    %v112 = vld [vmem:[#allocation2 + $0x200] sm:$0xff]
    %v113 = vld [vmem:[#allocation2 + $0x208] sm:$0xff]
    %v114 = vld [vmem:[#allocation2 + $0x210] sm:$0xff]
    %v115 = vld [vmem:[#allocation2 + $0x218] sm:$0xff]
    %v116 = vld [vmem:[#allocation2 + $0x220] sm:$0xff]
    %v117 = vld [vmem:[#allocation2 + $0x228] sm:$0xff]
    %v118 = vld [vmem:[#allocation2 + $0x230] sm:$0xff]
    %v119 = vld [vmem:[#allocation2 + $0x238] sm:$0xff]
    %v120 = vld [vmem:[#allocation2 + $0x240] sm:$0xff]
    %v121 = vld [vmem:[#allocation2 + $0x248] sm:$0xff]
    %v122 = vld [vmem:[#allocation2 + $0x250] sm:$0xff]
    %v123 = vld [vmem:[#allocation2 + $0x258] sm:$0xff]
    %v124 = vld [vmem:[#allocation2 + $0x260] sm:$0xff]
    %v125 = vld [vmem:[#allocation2 + $0x268] sm:$0xff]
    %v126 = vld [vmem:[#allocation2 + $0x270] sm:$0xff]
    %v127 = vld [vmem:[#allocation2 + $0x278] sm:$0xff]
    %v128 = vld [vmem:[#allocation2 + $0x280] sm:$0xff]
    %v129 = vld [vmem:[#allocation2 + $0x288] sm:$0xff]
    %v130 = vld [vmem:[#allocation2 + $0x290] sm:$0xff]
    %v131 = vld [vmem:[#allocation2 + $0x298] sm:$0xff]
    %v132 = vld [vmem:[#allocation2 + $0x2a0] sm:$0xff]
    %v133 = vld [vmem:[#allocation2 + $0x2a8] sm:$0xff]
    %v134 = vld [vmem:[#allocation2 + $0x2b0] sm:$0xff]
    %v135 = vld [vmem:[#allocation2 + $0x2b8] sm:$0xff]
    %v136 = vld [vmem:[#allocation2 + $0x2c0] sm:$0xff]
    %v137 = vld [vmem:[#allocation2 + $0x2c8] sm:$0xff]
    %v138 = vld [vmem:[#allocation2 + $0x2d0] sm:$0xff]
    %v139 = vld [vmem:[#allocation2 + $0x2d8] sm:$0xff]
    %v140 = vld [vmem:[#allocation2 + $0x2e0] sm:$0xff]
    %v141 = vld [vmem:[#allocation2 + $0x2e8] sm:$0xff]
    %v142 = vld [vmem:[#allocation2 + $0x2f0] sm:$0xff]
    %v143 = vld [vmem:[#allocation2 + $0x2f8] sm:$0xff]
    %v144 = vld [vmem:[#allocation2 + $0x300] sm:$0xff]
    %v145 = vld [vmem:[#allocation2 + $0x308] sm:$0xff]
    %v146 = vld [vmem:[#allocation2 + $0x310] sm:$0xff]
    %v147 = vld [vmem:[#allocation2 + $0x318] sm:$0xff]
    %v148 = vld [vmem:[#allocation2 + $0x320] sm:$0xff]
    %v149 = vld [vmem:[#allocation2 + $0x328] sm:$0xff]
    %v150 = vld [vmem:[#allocation2 + $0x330] sm:$0xff]
    %v151 = vld [vmem:[#allocation2 + $0x338] sm:$0xff]
    %v152 = vld [vmem:[#allocation2 + $0x340] sm:$0xff]
    %v153 = vld [vmem:[#allocation2 + $0x348] sm:$0xff]
    %v154 = vld [vmem:[#allocation2 + $0x350] sm:$0xff]
    %v155 = vld [vmem:[#allocation2 + $0x358] sm:$0xff]
    %v156 = vld [vmem:[#allocation2 + $0x360] sm:$0xff]
    %v157 = vld [vmem:[#allocation2 + $0x368] sm:$0xff]
    %v158 = vld [vmem:[#allocation2 + $0x370] sm:$0xff]
    %v159 = vld [vmem:[#allocation2 + $0x378] sm:$0xff]
    %v160 = vld [vmem:[#allocation2 + $0x380] sm:$0xff]
    %v161 = vld [vmem:[#allocation2 + $0x388] sm:$0xff]
    %v162 = vld [vmem:[#allocation2 + $0x390] sm:$0xff]
    %v163 = vld [vmem:[#allocation2 + $0x398] sm:$0xff]
    %v164 = vld [vmem:[#allocation2 + $0x3a0] sm:$0xff]
    %v165 = vld [vmem:[#allocation2 + $0x3a8] sm:$0xff]
    %v166 = vld [vmem:[#allocation2 + $0x3b0] sm:$0xff]
    %v167 = vld [vmem:[#allocation2 + $0x3b8] sm:$0xff]
    %v168 = vld [vmem:[#allocation2 + $0x3c0] sm:$0xff]
    %v169 = vld [vmem:[#allocation2 + $0x3c8] sm:$0xff]
    %v170 = vld [vmem:[#allocation2 + $0x3d0] sm:$0xff]
    %v171 = vld [vmem:[#allocation2 + $0x3d8] sm:$0xff]
    %v172 = vld [vmem:[#allocation2 + $0x3e0] sm:$0xff]
    %v173 = vld [vmem:[#allocation2 + $0x3e8] sm:$0xff]
    %v174 = vld [vmem:[#allocation2 + $0x3f0] sm:$0xff]
    %v175 = vld [vmem:[#allocation2 + $0x3f8] sm:$0xff]
    %v176 = vld [vmem:[#allocation2 + $0x400] sm:$0xff]
    %v177 = vld [vmem:[#allocation2 + $0x408] sm:$0xff]
    %v178 = vld [vmem:[#allocation2 + $0x410] sm:$0xff]
    %v179 = vld [vmem:[#allocation2 + $0x418] sm:$0xff]
    %v180 = vld [vmem:[#allocation2 + $0x420] sm:$0xff]
    %v181 = vld [vmem:[#allocation2 + $0x428] sm:$0xff]
    %v182 = vld [vmem:[#allocation2 + $0x430] sm:$0xff]
    %v183 = vld [vmem:[#allocation2 + $0x438] sm:$0xff]
    %v184 = vld [vmem:[#allocation2 + $0x440] sm:$0xff]
    %v185 = vld [vmem:[#allocation2 + $0x448] sm:$0xff]
    %v186 = vld [vmem:[#allocation2 + $0x450] sm:$0xff]
    %v187 = vld [vmem:[#allocation2 + $0x458] sm:$0xff]
    %v188 = vld [vmem:[#allocation2 + $0x460] sm:$0xff]
    %v189 = vld [vmem:[#allocation2 + $0x468] sm:$0xff]
    %v190 = vld [vmem:[#allocation2 + $0x470] sm:$0xff]
    %v191 = vld [vmem:[#allocation2 + $0x478] sm:$0xff]
    %v192 = vld [vmem:[#allocation2 + $0x480] sm:$0xff]
    %v193 = vld [vmem:[#allocation2 + $0x488] sm:$0xff]
    %v194 = vld [vmem:[#allocation2 + $0x490] sm:$0xff]
    %v195 = vld [vmem:[#allocation2 + $0x498] sm:$0xff]
    %v196 = vld [vmem:[#allocation2 + $0x4a0] sm:$0xff]
    %v197 = vld [vmem:[#allocation2 + $0x4a8] sm:$0xff]
    %v198 = vld [vmem:[#allocation2 + $0x4b0] sm:$0xff]
    %v199 = vld [vmem:[#allocation2 + $0x4b8] sm:$0xff]
    %v200 = vld [vmem:[#allocation2 + $0x4c0] sm:$0xff]
    %v201 = vld [vmem:[#allocation2 + $0x4c8] sm:$0xff]
    %v202 = vld [vmem:[#allocation2 + $0x4d0] sm:$0xff]
    %v203 = vld [vmem:[#allocation2 + $0x4d8] sm:$0xff]
    %v204 = vld [vmem:[#allocation2 + $0x4e0] sm:$0xff]
    %v205 = vld [vmem:[#allocation2 + $0x4e8] sm:$0xff]
    %v206 = vld [vmem:[#allocation2 + $0x4f0] sm:$0xff]
    %v207 = vld [vmem:[#allocation2 + $0x4f8] sm:$0xff]
    %v208 = vld [vmem:[#allocation2 + $0x500] sm:$0xff]
    %v209 = vld [vmem:[#allocation2 + $0x508] sm:$0xff]
    %v210 = vld [vmem:[#allocation2 + $0x510] sm:$0xff]
    %v211 = vld [vmem:[#allocation2 + $0x518] sm:$0xff]
    %v212 = vld [vmem:[#allocation2 + $0x520] sm:$0xff]
    %v213 = vld [vmem:[#allocation2 + $0x528] sm:$0xff]
    %v214 = vld [vmem:[#allocation2 + $0x530] sm:$0xff]
    %v215 = vld [vmem:[#allocation2 + $0x538] sm:$0xff]
    %v216 = vld [vmem:[#allocation2 + $0x540] sm:$0xff]
    %v217 = vld [vmem:[#allocation2 + $0x548] sm:$0xff]
    %v218 = vld [vmem:[#allocation2 + $0x550] sm:$0xff]
    %v219 = vld [vmem:[#allocation2 + $0x558] sm:$0xff]
    %v220 = vld [vmem:[#allocation2 + $0x560] sm:$0xff]
    %v221 = vld [vmem:[#allocation2 + $0x568] sm:$0xff]
    %v222 = vld [vmem:[#allocation2 + $0x570] sm:$0xff]
    %v223 = vpack.c.bf16 %v55, %v48
    %v224 = vpack.c.bf16 %v56, %v49
    %v225 = vpack.c.bf16 %v57, %v50
    %v226 = vpack.c.bf16 %v58, %v51
    %v227 = vpack.c.bf16 %v59, %v52
    %v228 = vpack.c.bf16 %v60, %v53
    %v229 = vpack.c.bf16 %v61, %v54
    %v230 = vpack.c.bf16 %v69, %v62
    %v231 = vpack.c.bf16 %v70, %v63
    %v232 = vpack.c.bf16 %v71, %v64
    %v233 = vpack.c.bf16 %v72, %v65
    %v234 = vpack.c.bf16 %v73, %v66
    %v235 = vpack.c.bf16 %v74, %v67
    %v236 = vpack.c.bf16 %v75, %v68
    %v237 = vpack.c.bf16 %v83, %v76
    %v238 = vpack.c.bf16 %v84, %v77
    %v239 = vpack.c.bf16 %v85, %v78
    %v240 = vpack.c.bf16 %v86, %v79
    %v241 = vpack.c.bf16 %v87, %v80
    %v242 = vpack.c.bf16 %v88, %v81
    %v243 = vpack.c.bf16 %v89, %v82
    %v244 = vpack.c.bf16 %v97, %v90
    %v245 = vpack.c.bf16 %v98, %v91
    %v246 = vpack.c.bf16 %v99, %v92
    %v247 = vpack.c.bf16 %v100, %v93
    %v248 = vpack.c.bf16 %v101, %v94
    %v249 = vpack.c.bf16 %v102, %v95
    %v250 = vpack.c.bf16 %v103, %v96
    %v251 = vpack.c.bf16 %v111, %v104
    %v252 = vpack.c.bf16 %v112, %v105
    %v253 = vpack.c.bf16 %v113, %v106
    %v254 = vpack.c.bf16 %v114, %v107
    %v255 = vpack.c.bf16 %v115, %v108
    %v256 = vpack.c.bf16 %v116, %v109
    %v257 = vpack.c.bf16 %v117, %v110
    %v258 = vpack.c.bf16 %v125, %v118
    %v259 = vpack.c.bf16 %v126, %v119
    %v260 = vpack.c.bf16 %v127, %v120
    %v261 = vpack.c.bf16 %v128, %v121
    %v262 = vpack.c.bf16 %v129, %v122
    %v263 = vpack.c.bf16 %v130, %v123
    %v264 = vpack.c.bf16 %v131, %v124
    %v265 = vpack.c.bf16 %v139, %v132
    %v266 = vpack.c.bf16 %v140, %v133
    %v267 = vpack.c.bf16 %v141, %v134
    %v268 = vpack.c.bf16 %v142, %v135
    %v269 = vpack.c.bf16 %v143, %v136
    %v270 = vpack.c.bf16 %v144, %v137
    %v271 = vpack.c.bf16 %v145, %v138
    %v272 = vpack.c.bf16 %v153, %v146
    %v273 = vpack.c.bf16 %v154, %v147
    %v274 = vpack.c.bf16 %v155, %v148
    %v275 = vpack.c.bf16 %v156, %v149
    %v276 = vpack.c.bf16 %v157, %v150
    %v277 = vpack.c.bf16 %v158, %v151
    %v278 = vpack.c.bf16 %v159, %v152
    %v279 = vpack.c.bf16 %v167, %v160
    %v280 = vpack.c.bf16 %v168, %v161
    %v281 = vpack.c.bf16 %v169, %v162
    %v282 = vpack.c.bf16 %v170, %v163
    %v283 = vpack.c.bf16 %v171, %v164
    %v284 = vpack.c.bf16 %v172, %v165
    %v285 = vpack.c.bf16 %v173, %v166
    %v286 = vpack.c.bf16 %v181, %v174
    %v287 = vpack.c.bf16 %v182, %v175
    %v288 = vpack.c.bf16 %v183, %v176
    %v289 = vpack.c.bf16 %v184, %v177
    %v290 = vpack.c.bf16 %v185, %v178
    %v291 = vpack.c.bf16 %v186, %v179
    %v292 = vpack.c.bf16 %v187, %v180
    %v293 = vpack.c.bf16 %v195, %v188
    %v294 = vpack.c.bf16 %v196, %v189
    %v295 = vpack.c.bf16 %v197, %v190
    %v296 = vpack.c.bf16 %v198, %v191
    %v297 = vpack.c.bf16 %v199, %v192
    %v298 = vpack.c.bf16 %v200, %v193
    %v299 = vpack.c.bf16 %v201, %v194
    %v300 = vpack.c.bf16 %v209, %v202
    %v301 = vpack.c.bf16 %v210, %v203
    %v302 = vpack.c.bf16 %v211, %v204
    %v303 = vpack.c.bf16 %v212, %v205
    %v304 = vpack.c.bf16 %v213, %v206
    %v305 = vpack.c.bf16 %v214, %v207
    %v306 = vpack.c.bf16 %v215, %v208
    %v307 = vpack.c.bf16 %v216, %v216
    %v308 = vpack.c.bf16 %v217, %v217
    %v309 = vpack.c.bf16 %v218, %v218
    %v310 = vpack.c.bf16 %v219, %v219
    %v311 = vpack.c.bf16 %v220, %v220
    %v312 = vpack.c.bf16 %v221, %v221
    %v313 = vpack.c.bf16 %v222, %v222
    %v314 = vld [vmem:[%s1] sm:$0xf]
    %v315 = vld [vmem:[%s1 + $0x4] sm:$0xf]
    %v316 = vld [vmem:[%s1 + $0x8] sm:$0xf]
    %v317 = vld [vmem:[%s1 + $0xc] sm:$0xf]
    %v318 = vld [vmem:[%s1 + $0x10] sm:$0xf]
    %v319 = vld [vmem:[%s1 + $0x14] sm:$0xf]
    %v320 = vld [vmem:[%s1 + $0x18] sm:$0xf]
    %v321 = vld [vmem:[%s1 + $0x1c] sm:$0xf]
    %v322 = vld [vmem:[%s1 + $0x20] sm:$0xf]
    %v323 = vld [vmem:[%s1 + $0x24] sm:$0xf]
    %v324 = vld [vmem:[%s1 + $0x28] sm:$0xf]
    %v325 = vld [vmem:[%s1 + $0x2c] sm:$0xf]
    %v326 = vld [vmem:[%s1 + $0x30] sm:$0xf]
    %v327 = vld [vmem:[%s1 + $0x34] sm:$0xf]
    %v328 = vld [vmem:[%s1 + $0x38] sm:$0xf]
    %v329 = vld [vmem:[%s1 + $0x3c] sm:$0xf]
    %v330 = vld [vmem:[%s1 + $0x40] sm:$0xf]
    %v331 = vld [vmem:[%s1 + $0x44] sm:$0xf]
    %v332 = vld [vmem:[%s1 + $0x48] sm:$0xf]
    %v333 = vld [vmem:[%s1 + $0x4c] sm:$0xf]
    %v334 = vld [vmem:[%s1 + $0x50] sm:$0xf]
    %v335 = vld [vmem:[%s1 + $0x54] sm:$0xf]
    %v336 = vld [vmem:[%s1 + $0x58] sm:$0xf]
    %v337 = vld [vmem:[%s1 + $0x5c] sm:$0xf]
    %v338 = vld [vmem:[%s1 + $0x60] sm:$0xf]
    %v339 = vld [vmem:[%s1 + $0x64] sm:$0xf]
    %v340 = vld [vmem:[%s1 + $0x68] sm:$0xf]
    %v341 = vld [vmem:[%s1 + $0x6c] sm:$0xf]
    %v342 = vld [vmem:[%s1 + $0x70] sm:$0xf]
    %v343 = vld [vmem:[%s1 + $0x74] sm:$0xf]
    %v344 = vld [vmem:[%s1 + $0x78] sm:$0xf]
    %v345 = vld [vmem:[%s1 + $0x7c] sm:$0xf]
    %v346 = vld [vmem:[%s1 + $0x80] sm:$0xf]
    %v347 = vld [vmem:[%s1 + $0x84] sm:$0xf]
    %v348 = vld [vmem:[%s1 + $0x88] sm:$0xf]
    %v349 = vld [vmem:[%s1 + $0x8c] sm:$0xf]
    %v350 = vld [vmem:[%s1 + $0x90] sm:$0xf]
    %v351 = vld [vmem:[%s1 + $0x94] sm:$0xf]
    %v352 = vld [vmem:[%s1 + $0x98] sm:$0xf]
    %v353 = vld [vmem:[%s1 + $0x9c] sm:$0xf]
    %v354 = vld [vmem:[%s1 + $0xa0] sm:$0xf]
    %v355 = vld [vmem:[%s1 + $0xa4] sm:$0xf]
    %v356 = vld [vmem:[%s1 + $0xa8] sm:$0xf]
    %v357 = vld [vmem:[%s1 + $0xac] sm:$0xf]
    %v358 = vld [vmem:[%s1 + $0xb0] sm:$0xf]
    %v359 = vld [vmem:[%s1 + $0xb4] sm:$0xf]
    %v360 = vld [vmem:[%s1 + $0xb8] sm:$0xf]
    %v361 = vld [vmem:[%s1 + $0xbc] sm:$0xf]
    %v362 = vld [vmem:[%s1 + $0xc0] sm:$0xf]
    %v363 = vld [vmem:[%s1 + $0xc4] sm:$0xf]
    %v364 = vld [vmem:[%s1 + $0xc8] sm:$0xf]
    %v365 = vld [vmem:[%s1 + $0xcc] sm:$0xf]
    %v366 = vld [vmem:[%s1 + $0xd0] sm:$0xf]
    %v367 = vld [vmem:[%s1 + $0xd4] sm:$0xf]
    %v368 = vld [vmem:[%s1 + $0xd8] sm:$0xf]
    %v369 = vld [vmem:[%s1 + $0xdc] sm:$0xf]
    %v370 = vld [vmem:[%s1 + $0xe0] sm:$0xf]
    %v371 = vld [vmem:[%s1 + $0xe4] sm:$0xf]
    %v372 = vld [vmem:[%s1 + $0xe8] sm:$0xf]
    %v373 = vld [vmem:[%s1 + $0xec] sm:$0xf]
    %v374 = vld [vmem:[%s1 + $0xf0] sm:$0xf]
    %v375 = vld [vmem:[%s1 + $0xf4] sm:$0xf]
    %v376 = vld [vmem:[%s1 + $0xf8] sm:$0xf]
    %v377 = vld [vmem:[%s1 + $0xfc] sm:$0xf]
    %v378 = vld [vmem:[%s1 + $0x100] sm:$0xf]
    %v379 = vld [vmem:[%s1 + $0x104] sm:$0xf]
    %v380 = vld [vmem:[%s1 + $0x108] sm:$0xf]
    %v381 = vld [vmem:[%s1 + $0x10c] sm:$0xf]
    %v382 = vld [vmem:[%s1 + $0x110] sm:$0xf]
    %v383 = vld [vmem:[%s1 + $0x114] sm:$0xf]
    %v384 = vld [vmem:[%s1 + $0x118] sm:$0xf]
    %v385 = vld [vmem:[%s1 + $0x11c] sm:$0xf]
    %v386 = vld [vmem:[%s1 + $0x120] sm:$0xf]
    %v387 = vld [vmem:[%s1 + $0x124] sm:$0xf]
    %v388 = vld [vmem:[%s1 + $0x128] sm:$0xf]
    %v389 = vld [vmem:[%s1 + $0x12c] sm:$0xf]
    %v390 = vld [vmem:[%s1 + $0x130] sm:$0xf]
    %v391 = vld [vmem:[%s1 + $0x134] sm:$0xf]
    %v392 = vld [vmem:[%s1 + $0x138] sm:$0xf]
    %v393 = vld [vmem:[%s1 + $0x13c] sm:$0xf]
    %v394 = vld [vmem:[%s1 + $0x140] sm:$0xf]
    %v395 = vld [vmem:[%s1 + $0x144] sm:$0xf]
    %v396 = vld [vmem:[%s1 + $0x148] sm:$0xf]
    %v397 = vld [vmem:[%s1 + $0x14c] sm:$0xf]
    %v398 = vld [vmem:[%s1 + $0x150] sm:$0xf]
    %v399 = vld [vmem:[%s1 + $0x154] sm:$0xf]
    %v400 = vld [vmem:[%s1 + $0x158] sm:$0xf]
    %v401 = vld [vmem:[%s1 + $0x15c] sm:$0xf]
    %v402 = vld [vmem:[%s1 + $0x160] sm:$0xf]
    %v403 = vld [vmem:[%s1 + $0x164] sm:$0xf]
    %v404 = vld [vmem:[%s1 + $0x168] sm:$0xf]
    %v405 = vld [vmem:[%s1 + $0x16c] sm:$0xf]
    %v406 = vld [vmem:[%s1 + $0x170] sm:$0xf]
    %v407 = vld [vmem:[%s1 + $0x174] sm:$0xf]
    %v408 = vld [vmem:[%s1 + $0x178] sm:$0xf]
    %v409 = vld [vmem:[%s1 + $0x17c] sm:$0xf]
    %v410 = vld [vmem:[%s1 + $0x180] sm:$0xf]
    %v411 = vld [vmem:[%s1 + $0x184] sm:$0xf]
    %v412 = vld [vmem:[%s2] sm:$0x1]
    %v414 = vlaneseq
    %v415 = vshrl.u32 %v414, 7
    %v416 = vsub.s32 0, %v415
    %v417 = vrot.slane %v412, %v416
    %v517 = vunpack.c.l.b16 %v314
    %v518 = vunpack.c.l.b16 %v315
    %v519 = vunpack.c.l.b16 %v316
    %v520 = vunpack.c.l.b16 %v317
    %v521 = vunpack.c.l.b16 %v318
    %v522 = vunpack.c.l.b16 %v319
    %v523 = vunpack.c.l.b16 %v320
    %v524 = vunpack.c.l.b16 %v321
    %v525 = vunpack.c.l.b16 %v322
    %v526 = vunpack.c.l.b16 %v323
    %v527 = vunpack.c.l.b16 %v324
    %v528 = vunpack.c.l.b16 %v325
    %v529 = vunpack.c.l.b16 %v326
    %v530 = vunpack.c.l.b16 %v327
    %v531 = vunpack.c.l.b16 %v328
    %v532 = vunpack.c.l.b16 %v329
    %v533 = vunpack.c.l.b16 %v330
    %v534 = vunpack.c.l.b16 %v331
    %v535 = vunpack.c.l.b16 %v332
    %v536 = vunpack.c.l.b16 %v333
    %v537 = vunpack.c.l.b16 %v334
    %v538 = vunpack.c.l.b16 %v335
    %v539 = vunpack.c.l.b16 %v336
    %v540 = vunpack.c.l.b16 %v337
    %v541 = vunpack.c.l.b16 %v338
    %v542 = vunpack.c.l.b16 %v339
    %v543 = vunpack.c.l.b16 %v340
    %v544 = vunpack.c.l.b16 %v341
    %v545 = vunpack.c.l.b16 %v342
    %v546 = vunpack.c.l.b16 %v343
    %v547 = vunpack.c.l.b16 %v344
    %v548 = vunpack.c.l.b16 %v345
    %v549 = vunpack.c.l.b16 %v346
    %v550 = vunpack.c.l.b16 %v347
    %v551 = vunpack.c.l.b16 %v348
    %v552 = vunpack.c.l.b16 %v349
    %v553 = vunpack.c.l.b16 %v350
    %v554 = vunpack.c.l.b16 %v351
    %v555 = vunpack.c.l.b16 %v352
    %v556 = vunpack.c.l.b16 %v353
    %v557 = vunpack.c.l.b16 %v354
    %v558 = vunpack.c.l.b16 %v355
    %v559 = vunpack.c.l.b16 %v356
    %v560 = vunpack.c.l.b16 %v357
    %v561 = vunpack.c.l.b16 %v358
    %v562 = vunpack.c.l.b16 %v359
    %v563 = vunpack.c.l.b16 %v360
    %v564 = vunpack.c.l.b16 %v361
    %v565 = vunpack.c.l.b16 %v362
    %v566 = vunpack.c.l.b16 %v363
    %v567 = vunpack.c.l.b16 %v364
    %v568 = vunpack.c.l.b16 %v365
    %v569 = vunpack.c.l.b16 %v366
    %v570 = vunpack.c.l.b16 %v367
    %v571 = vunpack.c.l.b16 %v368
    %v572 = vunpack.c.l.b16 %v369
    %v573 = vunpack.c.l.b16 %v370
    %v574 = vunpack.c.l.b16 %v371
    %v575 = vunpack.c.l.b16 %v372
    %v576 = vunpack.c.l.b16 %v373
    %v577 = vunpack.c.l.b16 %v374
    %v578 = vunpack.c.l.b16 %v375
    %v579 = vunpack.c.l.b16 %v376
    %v580 = vunpack.c.l.b16 %v377
    %v581 = vunpack.c.l.b16 %v378
    %v582 = vunpack.c.l.b16 %v379
    %v583 = vunpack.c.l.b16 %v380
    %v584 = vunpack.c.l.b16 %v381
    %v585 = vunpack.c.l.b16 %v382
    %v586 = vunpack.c.l.b16 %v383
    %v587 = vunpack.c.l.b16 %v384
    %v588 = vunpack.c.l.b16 %v385
    %v589 = vunpack.c.l.b16 %v386
    %v590 = vunpack.c.l.b16 %v387
    %v591 = vunpack.c.l.b16 %v388
    %v592 = vunpack.c.l.b16 %v389
    %v593 = vunpack.c.l.b16 %v390
    %v594 = vunpack.c.l.b16 %v391
    %v595 = vunpack.c.l.b16 %v392
    %v596 = vunpack.c.l.b16 %v393
    %v597 = vunpack.c.l.b16 %v394
    %v598 = vunpack.c.l.b16 %v395
    %v599 = vunpack.c.l.b16 %v396
    %v600 = vunpack.c.l.b16 %v397
    %v601 = vunpack.c.l.b16 %v398
    %v602 = vunpack.c.l.b16 %v399
    %v603 = vunpack.c.l.b16 %v400
    %v604 = vunpack.c.l.b16 %v401
    %v605 = vunpack.c.l.b16 %v402
    %v606 = vunpack.c.l.b16 %v403
    %v607 = vunpack.c.l.b16 %v404
    %v608 = vunpack.c.l.b16 %v405
    %v609 = vunpack.c.l.b16 %v406
    %v610 = vunpack.c.l.b16 %v407
    %v611 = vunpack.c.l.b16 %v408
    %v612 = vunpack.c.l.b16 %v409
    %v613 = vunpack.c.l.b16 %v410
    %v614 = vunpack.c.l.b16 %v411
    %v615 = vpack.c.b16 %v518, %v517
    %v616 = vpack.c.b16 %v520, %v519
    %v617 = vpack.c.b16 %v522, %v521
    %v618 = vpack.c.b16 %v524, %v523
    %v619 = vpack.c.b16 %v526, %v525
    %v620 = vpack.c.b16 %v528, %v527
    %v621 = vpack.c.b16 %v530, %v529
    %v622 = vpack.c.b16 %v532, %v531
    %v623 = vpack.c.b16 %v534, %v533
    %v624 = vpack.c.b16 %v536, %v535
    %v625 = vpack.c.b16 %v538, %v537
    %v626 = vpack.c.b16 %v540, %v539
    %v627 = vpack.c.b16 %v542, %v541
    %v628 = vpack.c.b16 %v544, %v543
    %v629 = vpack.c.b16 %v546, %v545
    %v630 = vpack.c.b16 %v548, %v547
    %v631 = vpack.c.b16 %v550, %v549
    %v632 = vpack.c.b16 %v552, %v551
    %v633 = vpack.c.b16 %v554, %v553
    %v634 = vpack.c.b16 %v556, %v555
    %v635 = vpack.c.b16 %v558, %v557
    %v636 = vpack.c.b16 %v560, %v559
    %v637 = vpack.c.b16 %v562, %v561
    %v638 = vpack.c.b16 %v564, %v563
    %v639 = vpack.c.b16 %v566, %v565
    %v640 = vpack.c.b16 %v568, %v567
    %v641 = vpack.c.b16 %v570, %v569
    %v642 = vpack.c.b16 %v572, %v571
    %v643 = vpack.c.b16 %v574, %v573
    %v644 = vpack.c.b16 %v576, %v575
    %v645 = vpack.c.b16 %v578, %v577
    %v646 = vpack.c.b16 %v580, %v579
    %v647 = vpack.c.b16 %v582, %v581
    %v648 = vpack.c.b16 %v584, %v583
    %v649 = vpack.c.b16 %v586, %v585
    %v650 = vpack.c.b16 %v588, %v587
    %v651 = vpack.c.b16 %v590, %v589
    %v652 = vpack.c.b16 %v592, %v591
    %v653 = vpack.c.b16 %v594, %v593
    %v654 = vpack.c.b16 %v596, %v595
    %v655 = vpack.c.b16 %v598, %v597
    %v656 = vpack.c.b16 %v600, %v599
    %v657 = vpack.c.b16 %v602, %v601
    %v658 = vpack.c.b16 %v604, %v603
    %v659 = vpack.c.b16 %v606, %v605
    %v660 = vpack.c.b16 %v608, %v607
    %v661 = vpack.c.b16 %v610, %v609
    %v662 = vpack.c.b16 %v612, %v611
    %v663 = vpack.c.b16 %v614, %v613
    %vm713 = vcmask 130048
    %v715 = vsel %vm713, %v229, 0
    %v718 = vsel %vm713, %v236, 0
    %v721 = vsel %vm713, %v243, 0
    %v724 = vsel %vm713, %v250, 0
    %v727 = vsel %vm713, %v257, 0
    %v730 = vsel %vm713, %v264, 0
    %v733 = vsel %vm713, %v271, 0
    %v736 = vsel %vm713, %v278, 0
    %v739 = vsel %vm713, %v285, 0
    %v742 = vsel %vm713, %v292, 0
    %v745 = vsel %vm713, %v299, 0
    %v748 = vsel %vm713, %v306, 0
    %v751 = vsel %vm713, %v313, 0
    %753 = vmatprep.subr.bf16.mxu0 0
    %754 = vmatpush1.bf16.msra.mxu0 %v615
    %755 = vmatprep.subr.bf16.mxu0 0
    %756 = vmatpush1.bf16.msra.mxu0 %v616
    %757 = vmatprep.subr.bf16.mxu0 0
    %758 = vmatpush1.bf16.msra.mxu0 %v617
    %759 = vmatprep.subr.bf16.mxu0 0
    %760 = vmatpush1.bf16.msra.mxu0 %v618
    %761 = vmatprep.subr.bf16.mxu0 0
    %762 = vmatpush1.bf16.msra.mxu0 %v619
    %763 = vmatprep.subr.bf16.mxu0 0
    %764 = vmatpush1.bf16.msra.mxu0 %v620
    %765 = vmatprep.subr.bf16.mxu0 0
    %766 = vmatpush1.bf16.msra.mxu0 %v621
    %767 = vmatprep.subr.bf16.mxu0 0
    %768 = vmatpush1.bf16.msra.mxu0 %v622
    %769 = vmatprep.subr.bf16.mxu0 0
    %770 = vmatpush1.bf16.msra.mxu0 %v623
    %771 = vmatprep.subr.bf16.mxu0 0
    %772 = vmatpush1.bf16.msra.mxu0 %v624
    %773 = vmatprep.subr.bf16.mxu0 0
    %774 = vmatpush1.bf16.msra.mxu0 %v625
    %775 = vmatprep.subr.bf16.mxu0 0
    %776 = vmatpush1.bf16.msra.mxu0 %v626
    %777 = vmatprep.subr.bf16.mxu0 0
    %778 = vmatpush1.bf16.msra.mxu0 %v627
    %779 = vmatprep.subr.bf16.mxu0 0
    %780 = vmatpush1.bf16.msra.mxu0 %v628
    %781 = vmatprep.subr.bf16.mxu0 0
    %782 = vmatpush1.bf16.msra.mxu0 %v629
    %783 = vmatprep.subr.bf16.mxu0 0
    %784 = vmatpush1.bf16.msra.mxu0 %v630
    %785 = vmatprep.mubr.bf16.mxu0 %v224
    %786 = vmatmul.mubr.bf16.gmra.mrb[0].mxu0 %v223
    %v787 = vpop.f32.mrb[0].mxu0
    %v788 = vadd.f32 %v417, %v787
    %v789 = vpop.f32.mrb[0].mxu0
    %v790 = vpop.f32.mrb[0].mxu0
    %v791 = vadd.f32 %v417, %v790
    %v792 = vpop.f32.mrb[0].mxu0
    %793 = vmatprep.mubr.bf16.mxu0 %v231
    %794 = vmatmul.mubr.bf16.gmra.mrb[0].mxu0 %v230
    %v795 = vpop.f32.mrb[0].mxu0
    %v796 = vadd.f32 %v417, %v795
    %v797 = vpop.f32.mrb[0].mxu0
    %v798 = vpop.f32.mrb[0].mxu0
    %v799 = vadd.f32 %v417, %v798
    %v800 = vpop.f32.mrb[0].mxu0
    %801 = vmatprep.mubr.bf16.mxu0 %v238
    %802 = vmatmul.mubr.bf16.gmra.mrb[0].mxu0 %v237
    %v803 = vpop.f32.mrb[0].mxu0
    %v804 = vadd.f32 %v417, %v803
    %v805 = vpop.f32.mrb[0].mxu0
    %v806 = vpop.f32.mrb[0].mxu0
    %v807 = vadd.f32 %v417, %v806
    %v808 = vpop.f32.mrb[0].mxu0
    %809 = vmatprep.mubr.bf16.mxu0 %v245
    %810 = vmatmul.mubr.bf16.gmra.mrb[0].mxu0 %v244
    %v811 = vpop.f32.mrb[0].mxu0
    %v812 = vadd.f32 %v417, %v811
    %v813 = vpop.f32.mrb[0].mxu0
    %v814 = vpop.f32.mrb[0].mxu0
    %v815 = vadd.f32 %v417, %v814
    %v816 = vpop.f32.mrb[0].mxu0
    %817 = vmatprep.mubr.bf16.mxu0 %v252
    %818 = vmatmul.mubr.bf16.gmra.mrb[0].mxu0 %v251
    %v819 = vpop.f32.mrb[0].mxu0
    %v820 = vadd.f32 %v417, %v819
    %v821 = vpop.f32.mrb[0].mxu0
    %v822 = vpop.f32.mrb[0].mxu0
    %v823 = vadd.f32 %v417, %v822
    %v824 = vpop.f32.mrb[0].mxu0
    %825 = vmatprep.mubr.bf16.mxu0 %v259
    %826 = vmatmul.mubr.bf16.gmra.mrb[0].mxu0 %v258
    %v827 = vpop.f32.mrb[0].mxu0
    %v828 = vadd.f32 %v417, %v827
    %v829 = vpop.f32.mrb[0].mxu0
    %v830 = vpop.f32.mrb[0].mxu0
    %v831 = vadd.f32 %v417, %v830
    %v832 = vpop.f32.mrb[0].mxu0
    %833 = vmatprep.mubr.bf16.mxu0 %v266
    %834 = vmatmul.mubr.bf16.gmra.mrb[0].mxu0 %v265
    %v835 = vpop.f32.mrb[0].mxu0
    %v836 = vadd.f32 %v417, %v835
    %v837 = vpop.f32.mrb[0].mxu0
    %v838 = vpop.f32.mrb[0].mxu0
    %v839 = vadd.f32 %v417, %v838
    %v840 = vpop.f32.mrb[0].mxu0
    %841 = vmatprep.mubr.bf16.mxu0 %v273
    %842 = vmatmul.mubr.bf16.gmra.mrb[0].mxu0 %v272
    %v843 = vpop.f32.mrb[0].mxu0
    %v844 = vadd.f32 %v417, %v843
    %v845 = vpop.f32.mrb[0].mxu0
    %v846 = vpop.f32.mrb[0].mxu0
    %v847 = vadd.f32 %v417, %v846
    %v848 = vpop.f32.mrb[0].mxu0
    %849 = vmatprep.mubr.bf16.mxu0 %v280
    %850 = vmatmul.mubr.bf16.gmra.mrb[0].mxu0 %v279
    %v851 = vpop.f32.mrb[0].mxu0
    %v852 = vadd.f32 %v417, %v851
    %v853 = vpop.f32.mrb[0].mxu0
    %v854 = vpop.f32.mrb[0].mxu0
    %v855 = vadd.f32 %v417, %v854
    %v856 = vpop.f32.mrb[0].mxu0
    %857 = vmatprep.mubr.bf16.mxu0 %v287
    %858 = vmatmul.mubr.bf16.gmra.mrb[0].mxu0 %v286
    %v859 = vpop.f32.mrb[0].mxu0
    %v860 = vadd.f32 %v417, %v859
    %v861 = vpop.f32.mrb[0].mxu0
    %v862 = vpop.f32.mrb[0].mxu0
    %v863 = vadd.f32 %v417, %v862
    %v864 = vpop.f32.mrb[0].mxu0
    %865 = vmatprep.mubr.bf16.mxu0 %v294
    %866 = vmatmul.mubr.bf16.gmra.mrb[0].mxu0 %v293
    %v867 = vpop.f32.mrb[0].mxu0
    %v868 = vadd.f32 %v417, %v867
    %v869 = vpop.f32.mrb[0].mxu0
    %v870 = vpop.f32.mrb[0].mxu0
    %v871 = vadd.f32 %v417, %v870
    %v872 = vpop.f32.mrb[0].mxu0
    %873 = vmatprep.mubr.bf16.mxu0 %v301
    %874 = vmatmul.mubr.bf16.gmra.mrb[0].mxu0 %v300
    %v875 = vpop.f32.mrb[0].mxu0
    %v876 = vadd.f32 %v417, %v875
    %v877 = vpop.f32.mrb[0].mxu0
    %v878 = vpop.f32.mrb[0].mxu0
    %v879 = vadd.f32 %v417, %v878
    %v880 = vpop.f32.mrb[0].mxu0
    %881 = vmatprep.mubr.bf16.mxu0 %v308
    %882 = vmatmul.mubr.bf16.gmra.mrb[0].mxu0 %v307
    %v883 = vpop.f32.mrb[0].mxu0
    %v884 = vadd.f32 %v417, %v883
    %v885 = vpop.f32.mrb[0].mxu0
    %v886 = vpop.f32.mrb[0].mxu0
    %v887 = vpop.f32.mrb[0].mxu0
    %888 = vdwg.mxu0
    %889 = vmatprep.subr.bf16.mxu0 0
    %890 = vmatpush1.bf16.msra.mxu0 %v631
    %891 = vmatprep.subr.bf16.mxu0 0
    %892 = vmatpush1.bf16.msra.mxu0 %v632
    %893 = vmatprep.subr.bf16.mxu0 0
    %894 = vmatpush1.bf16.msra.mxu0 %v633
    %895 = vmatprep.subr.bf16.mxu0 0
    %896 = vmatpush1.bf16.msra.mxu0 %v634
    %897 = vmatprep.subr.bf16.mxu0 0
    %898 = vmatpush1.bf16.msra.mxu0 %v635
    %899 = vmatprep.subr.bf16.mxu0 0
    %900 = vmatpush1.bf16.msra.mxu0 %v636
    %901 = vmatprep.subr.bf16.mxu0 0
    %902 = vmatpush1.bf16.msra.mxu0 %v637
    %903 = vmatprep.subr.bf16.mxu0 0
    %904 = vmatpush1.bf16.msra.mxu0 %v638
    %905 = vmatprep.subr.bf16.mxu0 0
    %906 = vmatpush1.bf16.msra.mxu0 %v639
    %907 = vmatprep.subr.bf16.mxu0 0
    %908 = vmatpush1.bf16.msra.mxu0 %v640
    %909 = vmatprep.subr.bf16.mxu0 0
    %910 = vmatpush1.bf16.msra.mxu0 %v641
    %911 = vmatprep.subr.bf16.mxu0 0
    %912 = vmatpush1.bf16.msra.mxu0 %v642
    %913 = vmatprep.subr.bf16.mxu0 0
    %914 = vmatpush1.bf16.msra.mxu0 %v643
    %915 = vmatprep.subr.bf16.mxu0 0
    %916 = vmatpush1.bf16.msra.mxu0 %v644
    %917 = vmatprep.subr.bf16.mxu0 0
    %918 = vmatpush1.bf16.msra.mxu0 %v645
    %919 = vmatprep.subr.bf16.mxu0 0
    %920 = vmatpush1.bf16.msra.mxu0 %v646
    %921 = vmatprep.mubr.bf16.mxu0 %v226
    %922 = vmatmul.mubr.bf16.gmra.mrb[0].mxu0 %v225
    %v923 = vpop.f32.mrb[0].mxu0
    %v924 = vadd.f32 %v788, %v923
    %v925 = vpop.f32.mrb[0].mxu0
    %v926 = vpop.f32.mrb[0].mxu0
    %v927 = vadd.f32 %v791, %v926
    %v928 = vpop.f32.mrb[0].mxu0
    %929 = vmatprep.mubr.bf16.mxu0 %v233
    %930 = vmatmul.mubr.bf16.gmra.mrb[0].mxu0 %v232
    %v931 = vpop.f32.mrb[0].mxu0
    %v932 = vadd.f32 %v796, %v931
    %v933 = vpop.f32.mrb[0].mxu0
    %v934 = vpop.f32.mrb[0].mxu0
    %v935 = vadd.f32 %v799, %v934
    %v936 = vpop.f32.mrb[0].mxu0
    %937 = vmatprep.mubr.bf16.mxu0 %v240
    %938 = vmatmul.mubr.bf16.gmra.mrb[0].mxu0 %v239
    %v939 = vpop.f32.mrb[0].mxu0
    %v940 = vadd.f32 %v804, %v939
    %v941 = vpop.f32.mrb[0].mxu0
    %v942 = vpop.f32.mrb[0].mxu0
    %v943 = vadd.f32 %v807, %v942
    %v944 = vpop.f32.mrb[0].mxu0
    %945 = vmatprep.mubr.bf16.mxu0 %v247
    %946 = vmatmul.mubr.bf16.gmra.mrb[0].mxu0 %v246
    %v947 = vpop.f32.mrb[0].mxu0
    %v948 = vadd.f32 %v812, %v947
    %v949 = vpop.f32.mrb[0].mxu0
    %v950 = vpop.f32.mrb[0].mxu0
    %v951 = vadd.f32 %v815, %v950
    %v952 = vpop.f32.mrb[0].mxu0
    %953 = vmatprep.mubr.bf16.mxu0 %v254
    %954 = vmatmul.mubr.bf16.gmra.mrb[0].mxu0 %v253
    %v955 = vpop.f32.mrb[0].mxu0
    %v956 = vadd.f32 %v820, %v955
    %v957 = vpop.f32.mrb[0].mxu0
    %v958 = vpop.f32.mrb[0].mxu0
    %v959 = vadd.f32 %v823, %v958
    %v960 = vpop.f32.mrb[0].mxu0
    %961 = vmatprep.mubr.bf16.mxu0 %v261
    %962 = vmatmul.mubr.bf16.gmra.mrb[0].mxu0 %v260
    %v963 = vpop.f32.mrb[0].mxu0
    %v964 = vadd.f32 %v828, %v963
    %v965 = vpop.f32.mrb[0].mxu0
    %v966 = vpop.f32.mrb[0].mxu0
    %v967 = vadd.f32 %v831, %v966
    %v968 = vpop.f32.mrb[0].mxu0
    %969 = vmatprep.mubr.bf16.mxu0 %v268
    %970 = vmatmul.mubr.bf16.gmra.mrb[0].mxu0 %v267
    %v971 = vpop.f32.mrb[0].mxu0
    %v972 = vadd.f32 %v836, %v971
    %v973 = vpop.f32.mrb[0].mxu0
    %v974 = vpop.f32.mrb[0].mxu0
    %v975 = vadd.f32 %v839, %v974
    %v976 = vpop.f32.mrb[0].mxu0
    %977 = vmatprep.mubr.bf16.mxu0 %v275
    %978 = vmatmul.mubr.bf16.gmra.mrb[0].mxu0 %v274
    %v979 = vpop.f32.mrb[0].mxu0
    %v980 = vadd.f32 %v844, %v979
    %v981 = vpop.f32.mrb[0].mxu0
    %v982 = vpop.f32.mrb[0].mxu0
    %v983 = vadd.f32 %v847, %v982
    %v984 = vpop.f32.mrb[0].mxu0
    %985 = vmatprep.mubr.bf16.mxu0 %v282
    %986 = vmatmul.mubr.bf16.gmra.mrb[0].mxu0 %v281
    %v987 = vpop.f32.mrb[0].mxu0
    %v988 = vadd.f32 %v852, %v987
    %v989 = vpop.f32.mrb[0].mxu0
    %v990 = vpop.f32.mrb[0].mxu0
    %v991 = vadd.f32 %v855, %v990
    %v992 = vpop.f32.mrb[0].mxu0
    %993 = vmatprep.mubr.bf16.mxu0 %v289
    %994 = vmatmul.mubr.bf16.gmra.mrb[0].mxu0 %v288
    %v995 = vpop.f32.mrb[0].mxu0
    %v996 = vadd.f32 %v860, %v995
    %v997 = vpop.f32.mrb[0].mxu0
    %v998 = vpop.f32.mrb[0].mxu0
    %v999 = vadd.f32 %v863, %v998
    %v1000 = vpop.f32.mrb[0].mxu0
    %1001 = vmatprep.mubr.bf16.mxu0 %v296
    %1002 = vmatmul.mubr.bf16.gmra.mrb[0].mxu0 %v295
    %v1003 = vpop.f32.mrb[0].mxu0
    %v1004 = vadd.f32 %v868, %v1003
    %v1005 = vpop.f32.mrb[0].mxu0
    %v1006 = vpop.f32.mrb[0].mxu0
    %v1007 = vadd.f32 %v871, %v1006
    %v1008 = vpop.f32.mrb[0].mxu0
    %1009 = vmatprep.mubr.bf16.mxu0 %v303
    %1010 = vmatmul.mubr.bf16.gmra.mrb[0].mxu0 %v302
    %v1011 = vpop.f32.mrb[0].mxu0
    %v1012 = vadd.f32 %v876, %v1011
    %v1013 = vpop.f32.mrb[0].mxu0
    %v1014 = vpop.f32.mrb[0].mxu0
    %v1015 = vadd.f32 %v879, %v1014
    %v1016 = vpop.f32.mrb[0].mxu0
    %1017 = vmatprep.mubr.bf16.mxu0 %v310
    %1018 = vmatmul.mubr.bf16.gmra.mrb[0].mxu0 %v309
    %v1019 = vpop.f32.mrb[0].mxu0
    %v1020 = vadd.f32 %v884, %v1019
    %v1021 = vpop.f32.mrb[0].mxu0
    %v1022 = vpop.f32.mrb[0].mxu0
    %v1023 = vpop.f32.mrb[0].mxu0
    %1024 = vdwg.mxu0
    %1025 = vmatprep.subr.bf16.mxu0 0
    %1026 = vmatpush1.bf16.msra.mxu0 %v647
    %1027 = vmatprep.subr.bf16.mxu0 0
    %1028 = vmatpush1.bf16.msra.mxu0 %v648
    %1029 = vmatprep.subr.bf16.mxu0 0
    %1030 = vmatpush1.bf16.msra.mxu0 %v649
    %1031 = vmatprep.subr.bf16.mxu0 0
    %1032 = vmatpush1.bf16.msra.mxu0 %v650
    %1033 = vmatprep.subr.bf16.mxu0 0
    %1034 = vmatpush1.bf16.msra.mxu0 %v651
    %1035 = vmatprep.subr.bf16.mxu0 0
    %1036 = vmatpush1.bf16.msra.mxu0 %v652
    %1037 = vmatprep.subr.bf16.mxu0 0
    %1038 = vmatpush1.bf16.msra.mxu0 %v653
    %1039 = vmatprep.subr.bf16.mxu0 0
    %1040 = vmatpush1.bf16.msra.mxu0 %v654
    %1041 = vmatprep.subr.bf16.mxu0 0
    %1042 = vmatpush1.bf16.msra.mxu0 %v655
    %1043 = vmatprep.subr.bf16.mxu0 0
    %1044 = vmatpush1.bf16.msra.mxu0 %v656
    %1045 = vmatprep.subr.bf16.mxu0 0
    %1046 = vmatpush1.bf16.msra.mxu0 %v657
    %1047 = vmatprep.subr.bf16.mxu0 0
    %1048 = vmatpush1.bf16.msra.mxu0 %v658
    %1049 = vmatprep.subr.bf16.mxu0 0
    %1050 = vmatpush1.bf16.msra.mxu0 %v659
    %1051 = vmatprep.subr.bf16.mxu0 0
    %1052 = vmatpush1.bf16.msra.mxu0 %v660
    %1053 = vmatprep.subr.bf16.mxu0 0
    %1054 = vmatpush1.bf16.msra.mxu0 %v661
    %1055 = vmatprep.subr.bf16.mxu0 0
    %1056 = vmatpush1.bf16.msra.mxu0 %v662
    %1057 = vmatprep.mubr.bf16.mxu0 %v228
    %1058 = vmatmul.mubr.bf16.gmra.mrb[0].mxu0 %v227
    %v1059 = vpop.f32.mrb[0].mxu0
    %v1060 = vadd.f32 %v924, %v1059
    %v1061 = vpop.f32.mrb[0].mxu0
    %v1062 = vpop.f32.mrb[0].mxu0
    %v1063 = vadd.f32 %v927, %v1062
    %v1064 = vpop.f32.mrb[0].mxu0
    %1065 = vmatprep.mubr.bf16.mxu0 %v235
    %1066 = vmatmul.mubr.bf16.gmra.mrb[0].mxu0 %v234
    %v1067 = vpop.f32.mrb[0].mxu0
    %v1068 = vadd.f32 %v932, %v1067
    %v1069 = vpop.f32.mrb[0].mxu0
    %v1070 = vpop.f32.mrb[0].mxu0
    %v1071 = vadd.f32 %v935, %v1070
    %v1072 = vpop.f32.mrb[0].mxu0
    %1073 = vmatprep.mubr.bf16.mxu0 %v242
    %1074 = vmatmul.mubr.bf16.gmra.mrb[0].mxu0 %v241
    %v1075 = vpop.f32.mrb[0].mxu0
    %v1076 = vadd.f32 %v940, %v1075
    %v1077 = vpop.f32.mrb[0].mxu0
    %v1078 = vpop.f32.mrb[0].mxu0
    %v1079 = vadd.f32 %v943, %v1078
    %v1080 = vpop.f32.mrb[0].mxu0
    %1081 = vmatprep.mubr.bf16.mxu0 %v249
    %1082 = vmatmul.mubr.bf16.gmra.mrb[0].mxu0 %v248
    %v1083 = vpop.f32.mrb[0].mxu0
    %v1084 = vadd.f32 %v948, %v1083
    %v1085 = vpop.f32.mrb[0].mxu0
    %v1086 = vpop.f32.mrb[0].mxu0
    %v1087 = vadd.f32 %v951, %v1086
    %v1088 = vpop.f32.mrb[0].mxu0
    %1089 = vmatprep.mubr.bf16.mxu0 %v256
    %1090 = vmatmul.mubr.bf16.gmra.mrb[0].mxu0 %v255
    %v1091 = vpop.f32.mrb[0].mxu0
    %v1092 = vadd.f32 %v956, %v1091
    %v1093 = vpop.f32.mrb[0].mxu0
    %v1094 = vpop.f32.mrb[0].mxu0
    %v1095 = vadd.f32 %v959, %v1094
    %v1096 = vpop.f32.mrb[0].mxu0
    %1097 = vmatprep.mubr.bf16.mxu0 %v263
    %1098 = vmatmul.mubr.bf16.gmra.mrb[0].mxu0 %v262
    %v1099 = vpop.f32.mrb[0].mxu0
    %v1100 = vadd.f32 %v964, %v1099
    %v1101 = vpop.f32.mrb[0].mxu0
    %v1102 = vpop.f32.mrb[0].mxu0
    %v1103 = vadd.f32 %v967, %v1102
    %v1104 = vpop.f32.mrb[0].mxu0
    %1105 = vmatprep.mubr.bf16.mxu0 %v270
    %1106 = vmatmul.mubr.bf16.gmra.mrb[0].mxu0 %v269
    %v1107 = vpop.f32.mrb[0].mxu0
    %v1108 = vadd.f32 %v972, %v1107
    %v1109 = vpop.f32.mrb[0].mxu0
    %v1110 = vpop.f32.mrb[0].mxu0
    %v1111 = vadd.f32 %v975, %v1110
    %v1112 = vpop.f32.mrb[0].mxu0
    %1113 = vmatprep.mubr.bf16.mxu0 %v277
    %1114 = vmatmul.mubr.bf16.gmra.mrb[0].mxu0 %v276
    %v1115 = vpop.f32.mrb[0].mxu0
    %v1116 = vadd.f32 %v980, %v1115
    %v1117 = vpop.f32.mrb[0].mxu0
    %v1118 = vpop.f32.mrb[0].mxu0
    %v1119 = vadd.f32 %v983, %v1118
    %v1120 = vpop.f32.mrb[0].mxu0
    %1121 = vmatprep.mubr.bf16.mxu0 %v284
    %1122 = vmatmul.mubr.bf16.gmra.mrb[0].mxu0 %v283
    %v1123 = vpop.f32.mrb[0].mxu0
    %v1124 = vadd.f32 %v988, %v1123
    %v1125 = vpop.f32.mrb[0].mxu0
    %v1126 = vpop.f32.mrb[0].mxu0
    %v1127 = vadd.f32 %v991, %v1126
    %v1128 = vpop.f32.mrb[0].mxu0
    %1129 = vmatprep.mubr.bf16.mxu0 %v291
    %1130 = vmatmul.mubr.bf16.gmra.mrb[0].mxu0 %v290
    %v1131 = vpop.f32.mrb[0].mxu0
    %v1132 = vadd.f32 %v996, %v1131
    %v1133 = vpop.f32.mrb[0].mxu0
    %v1134 = vpop.f32.mrb[0].mxu0
    %v1135 = vadd.f32 %v999, %v1134
    %v1136 = vpop.f32.mrb[0].mxu0
    %1137 = vmatprep.mubr.bf16.mxu0 %v298
    %1138 = vmatmul.mubr.bf16.gmra.mrb[0].mxu0 %v297
    %v1139 = vpop.f32.mrb[0].mxu0
    %v1140 = vadd.f32 %v1004, %v1139
    %v1141 = vpop.f32.mrb[0].mxu0
    %v1142 = vpop.f32.mrb[0].mxu0
    %v1143 = vadd.f32 %v1007, %v1142
    %v1144 = vpop.f32.mrb[0].mxu0
    %1145 = vmatprep.mubr.bf16.mxu0 %v305
    %1146 = vmatmul.mubr.bf16.gmra.mrb[0].mxu0 %v304
    %v1147 = vpop.f32.mrb[0].mxu0
    %v1148 = vadd.f32 %v1012, %v1147
    %v1149 = vpop.f32.mrb[0].mxu0
    %v1150 = vpop.f32.mrb[0].mxu0
    %v1151 = vadd.f32 %v1015, %v1150
    %v1152 = vpop.f32.mrb[0].mxu0
    %1153 = vmatprep.mubr.bf16.mxu0 %v312
    %1154 = vmatmul.mubr.bf16.gmra.mrb[0].mxu0 %v311
    %v1155 = vpop.f32.mrb[0].mxu0
    %v1156 = vadd.f32 %v1020, %v1155
    %v1157 = vpop.f32.mrb[0].mxu0
    %v1158 = vpop.f32.mrb[0].mxu0
    %v1159 = vpop.f32.mrb[0].mxu0
    %1160 = vdwg.mxu0
    %1161 = vmatprep.subr.bf16.mxu0 0
    %1162 = vmatpush1.bf16.msra.mxu0 %v663
    %1163 = vmatprep.subr.bf16.mxu0 0
    %1164 = vmatpush1.bf16.msra.mxu0 0
    %1165 = vmatprep.subr.bf16.mxu0 0
    %1166 = vmatpush1.bf16.msra.mxu0 0
    %1167 = vmatprep.subr.bf16.mxu0 0
    %1168 = vmatpush1.bf16.msra.mxu0 0
    %1169 = vmatprep.subr.bf16.mxu0 0
    %1170 = vmatpush1.bf16.msra.mxu0 0
    %1171 = vmatprep.subr.bf16.mxu0 0
    %1172 = vmatpush1.bf16.msra.mxu0 0
    %1173 = vmatprep.subr.bf16.mxu0 0
    %1174 = vmatpush1.bf16.msra.mxu0 0
    %1175 = vmatprep.subr.bf16.mxu0 0
    %1176 = vmatpush1.bf16.msra.mxu0 0
    %1177 = vmatprep.subr.bf16.mxu0 0
    %1178 = vmatpush1.bf16.msra.mxu0 0
    %1179 = vmatprep.subr.bf16.mxu0 0
    %1180 = vmatpush1.bf16.msra.mxu0 0
    %1181 = vmatprep.subr.bf16.mxu0 0
    %1182 = vmatpush1.bf16.msra.mxu0 0
    %1183 = vmatprep.subr.bf16.mxu0 0
    %1184 = vmatpush1.bf16.msra.mxu0 0
    %1185 = vmatprep.subr.bf16.mxu0 0
    %1186 = vmatpush1.bf16.msra.mxu0 0
    %1187 = vmatprep.subr.bf16.mxu0 0
    %1188 = vmatpush1.bf16.msra.mxu0 0
    %1189 = vmatprep.subr.bf16.mxu0 0
    %1190 = vmatpush1.bf16.msra.mxu0 0
    %1191 = vmatprep.subr.bf16.mxu0 0
    %1192 = vmatpush1.bf16.msra.mxu0 0
    %1193 = vmatprep.mubr.bf16.mxu0 0
    %1194 = vmatmul.mubr.bf16.gmra.mrb[0].mxu0 %v715
    %v1195 = vpop.f32.mrb[0].mxu0
    %v1196 = vadd.f32 %v1060, %v1195
    %v1197 = vpop.f32.mrb[0].mxu0
    %v1198 = vpop.f32.mrb[0].mxu0
    %v1199 = vadd.f32 %v1063, %v1198
    %v1200 = vpop.f32.mrb[0].mxu0
    %1201 = vmatprep.mubr.bf16.mxu0 0
    %1202 = vmatmul.mubr.bf16.gmra.mrb[0].mxu0 %v718
    %v1203 = vpop.f32.mrb[0].mxu0
    %v1204 = vadd.f32 %v1068, %v1203
    %v1205 = vpop.f32.mrb[0].mxu0
    %v1206 = vpop.f32.mrb[0].mxu0
    %v1207 = vadd.f32 %v1071, %v1206
    %v1208 = vpop.f32.mrb[0].mxu0
    %1209 = vmatprep.mubr.bf16.mxu0 0
    %1210 = vmatmul.mubr.bf16.gmra.mrb[0].mxu0 %v721
    %v1211 = vpop.f32.mrb[0].mxu0
    %v1212 = vadd.f32 %v1076, %v1211
    %v1213 = vpop.f32.mrb[0].mxu0
    %v1214 = vpop.f32.mrb[0].mxu0
    %v1215 = vadd.f32 %v1079, %v1214
    %v1216 = vpop.f32.mrb[0].mxu0
    %1217 = vmatprep.mubr.bf16.mxu0 0
    %1218 = vmatmul.mubr.bf16.gmra.mrb[0].mxu0 %v724
    %v1219 = vpop.f32.mrb[0].mxu0
    %v1220 = vadd.f32 %v1084, %v1219
    %v1221 = vpop.f32.mrb[0].mxu0
    %v1222 = vpop.f32.mrb[0].mxu0
    %v1223 = vadd.f32 %v1087, %v1222
    %v1224 = vpop.f32.mrb[0].mxu0
    %1225 = vmatprep.mubr.bf16.mxu0 0
    %1226 = vmatmul.mubr.bf16.gmra.mrb[0].mxu0 %v727
    %v1227 = vpop.f32.mrb[0].mxu0
    %v1228 = vadd.f32 %v1092, %v1227
    %v1229 = vpop.f32.mrb[0].mxu0
    %v1230 = vpop.f32.mrb[0].mxu0
    %v1231 = vadd.f32 %v1095, %v1230
    %v1232 = vpop.f32.mrb[0].mxu0
    %1233 = vmatprep.mubr.bf16.mxu0 0
    %1234 = vmatmul.mubr.bf16.gmra.mrb[0].mxu0 %v730
    %v1235 = vpop.f32.mrb[0].mxu0
    %v1236 = vadd.f32 %v1100, %v1235
    %v1237 = vpop.f32.mrb[0].mxu0
    %v1238 = vpop.f32.mrb[0].mxu0
    %v1239 = vadd.f32 %v1103, %v1238
    %v1240 = vpop.f32.mrb[0].mxu0
    %1241 = vmatprep.mubr.bf16.mxu0 0
    %1242 = vmatmul.mubr.bf16.gmra.mrb[0].mxu0 %v733
    %v1243 = vpop.f32.mrb[0].mxu0
    %v1244 = vadd.f32 %v1108, %v1243
    %v1245 = vpop.f32.mrb[0].mxu0
    %v1246 = vpop.f32.mrb[0].mxu0
    %v1247 = vadd.f32 %v1111, %v1246
    %v1248 = vpop.f32.mrb[0].mxu0
    %1249 = vmatprep.mubr.bf16.mxu0 0
    %1250 = vmatmul.mubr.bf16.gmra.mrb[0].mxu0 %v736
    %v1251 = vpop.f32.mrb[0].mxu0
    %v1252 = vadd.f32 %v1116, %v1251
    %v1253 = vpop.f32.mrb[0].mxu0
    %v1254 = vpop.f32.mrb[0].mxu0
    %v1255 = vadd.f32 %v1119, %v1254
    %v1256 = vpop.f32.mrb[0].mxu0
    %1257 = vmatprep.mubr.bf16.mxu0 0
    %1258 = vmatmul.mubr.bf16.gmra.mrb[0].mxu0 %v739
    %v1259 = vpop.f32.mrb[0].mxu0
    %v1260 = vadd.f32 %v1124, %v1259
    %v1261 = vpop.f32.mrb[0].mxu0
    %v1262 = vpop.f32.mrb[0].mxu0
    %v1263 = vadd.f32 %v1127, %v1262
    %v1264 = vpop.f32.mrb[0].mxu0
    %1265 = vmatprep.mubr.bf16.mxu0 0
    %1266 = vmatmul.mubr.bf16.gmra.mrb[0].mxu0 %v742
    %v1267 = vpop.f32.mrb[0].mxu0
    %v1268 = vadd.f32 %v1132, %v1267
    %v1269 = vpop.f32.mrb[0].mxu0
    %v1270 = vpop.f32.mrb[0].mxu0
    %v1271 = vadd.f32 %v1135, %v1270
    %v1272 = vpop.f32.mrb[0].mxu0
    %1273 = vmatprep.mubr.bf16.mxu0 0
    %1274 = vmatmul.mubr.bf16.gmra.mrb[0].mxu0 %v745
    %v1275 = vpop.f32.mrb[0].mxu0
    %v1276 = vadd.f32 %v1140, %v1275
    %v1277 = vpop.f32.mrb[0].mxu0
    %v1278 = vpop.f32.mrb[0].mxu0
    %v1279 = vadd.f32 %v1143, %v1278
    %v1280 = vpop.f32.mrb[0].mxu0
    %1281 = vmatprep.mubr.bf16.mxu0 0
    %1282 = vmatmul.mubr.bf16.gmra.mrb[0].mxu0 %v748
    %v1283 = vpop.f32.mrb[0].mxu0
    %v1284 = vadd.f32 %v1148, %v1283
    %v1285 = vpop.f32.mrb[0].mxu0
    %v1286 = vpop.f32.mrb[0].mxu0
    %v1287 = vadd.f32 %v1151, %v1286
    %v1288 = vpop.f32.mrb[0].mxu0
    %1289 = vmatprep.mubr.bf16.mxu0 0
    %1290 = vmatmul.mubr.bf16.gmra.mrb[0].mxu0 %v751
    %v1291 = vpop.f32.mrb[0].mxu0
    %v1292 = vadd.f32 %v1156, %v1291
    %v1293 = vpop.f32.mrb[0].mxu0
    %v1294 = vpop.f32.mrb[0].mxu0
    %v1295 = vpop.f32.mrb[0].mxu0
    %1296 = vdwg.mxu0
    %v1297 = vmax.f32 %v1196, 0.0
    %v1298 = vmax.f32 %v1199, 0.0
    %v1299 = vmax.f32 %v1204, 0.0
    %v1300 = vmax.f32 %v1207, 0.0
    %v1301 = vmax.f32 %v1212, 0.0
    %v1302 = vmax.f32 %v1215, 0.0
    %v1303 = vmax.f32 %v1220, 0.0
    %v1304 = vmax.f32 %v1223, 0.0
    %v1305 = vmax.f32 %v1228, 0.0
    %v1306 = vmax.f32 %v1231, 0.0
    %v1307 = vmax.f32 %v1236, 0.0
    %v1308 = vmax.f32 %v1239, 0.0
    %v1309 = vmax.f32 %v1244, 0.0
    %v1310 = vmax.f32 %v1247, 0.0
    %v1311 = vmax.f32 %v1252, 0.0
    %v1312 = vmax.f32 %v1255, 0.0
    %v1313 = vmax.f32 %v1260, 0.0
    %v1314 = vmax.f32 %v1263, 0.0
    %v1315 = vmax.f32 %v1268, 0.0
    %v1316 = vmax.f32 %v1271, 0.0
    %v1317 = vmax.f32 %v1276, 0.0
    %v1318 = vmax.f32 %v1279, 0.0
    %v1319 = vmax.f32 %v1284, 0.0
    %v1320 = vmax.f32 %v1287, 0.0
    %v1321 = vmax.f32 %v1292, 0.0
    %v1322 = vpack.c.bf16 %v1298, %v1297
    %v1323 = vpack.c.bf16 %v1300, %v1299
    %v1324 = vpack.c.bf16 %v1302, %v1301
    %v1325 = vpack.c.bf16 %v1304, %v1303
    %v1326 = vpack.c.bf16 %v1306, %v1305
    %v1327 = vpack.c.bf16 %v1308, %v1307
    %v1328 = vpack.c.bf16 %v1310, %v1309
    %v1329 = vpack.c.bf16 %v1312, %v1311
    %v1330 = vpack.c.bf16 %v1314, %v1313
    %v1331 = vpack.c.bf16 %v1316, %v1315
    %v1332 = vpack.c.bf16 %v1318, %v1317
    %v1333 = vpack.c.bf16 %v1320, %v1319
    %v1334 = vpack.c.bf16 %v1321, %v1321
    %v1335 = vld [vmem:[%s3] sm:$0xf]
    %v1336 = vld [vmem:[%s3 + $0x4] sm:$0xf]
    %v1337 = vld [vmem:[%s3 + $0x8] sm:$0xf]
    %v1338 = vld [vmem:[%s3 + $0xc] sm:$0xf]
    %v1339 = vld [vmem:[%s3 + $0x10] sm:$0xf]
    %v1340 = vld [vmem:[%s3 + $0x14] sm:$0xf]
    %v1341 = vld [vmem:[%s3 + $0x18] sm:$0xf]
    %v1342 = vld [vmem:[%s3 + $0x1c] sm:$0xf]
    %v1343 = vld [vmem:[%s4] sm:$0x1]
    %v1345 = vlaneseq
    %v1346 = vshrl.u32 %v1345, 7
    %v1347 = vsub.s32 0, %v1346
    %v1348 = vrot.slane %v1343, %v1347
    %v1358 = vunpack.c.l.b16 %v1335
    %v1359 = vunpack.c.l.b16 %v1336
    %v1360 = vunpack.c.l.b16 %v1337
    %v1361 = vunpack.c.l.b16 %v1338
    %v1362 = vunpack.c.l.b16 %v1339
    %v1363 = vunpack.c.l.b16 %v1340
    %v1364 = vunpack.c.l.b16 %v1341
    %v1365 = vunpack.c.l.b16 %v1342
    %v1366 = vpack.c.b16 %v1359, %v1358
    %v1367 = vpack.c.b16 %v1361, %v1360
    %v1368 = vpack.c.b16 %v1363, %v1362
    %v1369 = vpack.c.b16 %v1365, %v1364
    %vm1374 = vcmask 523264
    %v1376 = vsel %vm1374, %v1322, 0
    %v1379 = vsel %vm1374, %v1323, 0
    %v1382 = vsel %vm1374, %v1324, 0
    %v1385 = vsel %vm1374, %v1325, 0
    %v1388 = vsel %vm1374, %v1326, 0
    %v1391 = vsel %vm1374, %v1327, 0
    %v1394 = vsel %vm1374, %v1328, 0
    %v1397 = vsel %vm1374, %v1329, 0
    %v1400 = vsel %vm1374, %v1330, 0
    %v1403 = vsel %vm1374, %v1331, 0
    %v1406 = vsel %vm1374, %v1332, 0
    %v1409 = vsel %vm1374, %v1333, 0
    %v1412 = vsel %vm1374, %v1334, 0
    %1414 = vmatprep.subr.bf16.mxu0 0
    %1415 = vmatpush1.bf16.msra.mxu0 %v1366
    %1416 = vmatprep.subr.bf16.mxu0 0
    %1417 = vmatpush1.bf16.msra.mxu0 %v1367
    %1418 = vmatprep.subr.bf16.mxu0 0
    %1419 = vmatpush1.bf16.msra.mxu0 %v1368
    %1420 = vmatprep.subr.bf16.mxu0 0
    %1421 = vmatpush1.bf16.msra.mxu0 %v1369
    %1422 = vmatprep.subr.bf16.mxu0 0
    %1423 = vmatpush1.bf16.msra.mxu0 0
    %1424 = vmatprep.subr.bf16.mxu0 0
    %1425 = vmatpush1.bf16.msra.mxu0 0
    %1426 = vmatprep.subr.bf16.mxu0 0
    %1427 = vmatpush1.bf16.msra.mxu0 0
    %1428 = vmatprep.subr.bf16.mxu0 0
    %1429 = vmatpush1.bf16.msra.mxu0 0
    %1430 = vmatprep.subr.bf16.mxu0 0
    %1431 = vmatpush1.bf16.msra.mxu0 0
    %1432 = vmatprep.subr.bf16.mxu0 0
    %1433 = vmatpush1.bf16.msra.mxu0 0
    %1434 = vmatprep.subr.bf16.mxu0 0
    %1435 = vmatpush1.bf16.msra.mxu0 0
    %1436 = vmatprep.subr.bf16.mxu0 0
    %1437 = vmatpush1.bf16.msra.mxu0 0
    %1438 = vmatprep.subr.bf16.mxu0 0
    %1439 = vmatpush1.bf16.msra.mxu0 0
    %1440 = vmatprep.subr.bf16.mxu0 0
    %1441 = vmatpush1.bf16.msra.mxu0 0
    %1442 = vmatprep.subr.bf16.mxu0 0
    %1443 = vmatpush1.bf16.msra.mxu0 0
    %1444 = vmatprep.subr.bf16.mxu0 0
    %1445 = vmatpush1.bf16.msra.mxu0 0
    %1446 = vmatprep.mubr.bf16.mxu0 0
    %1447 = vmatmul.mubr.bf16.gmra.mrb[0].mxu0 %v1376
    %v1448 = vpop.f32.mrb[0].mxu0
    %v1449 = vadd.f32 %v1348, %v1448
    %v1450 = vpop.f32.mrb[0].mxu0
    %v1451 = vpop.f32.mrb[0].mxu0
    %v1452 = vadd.f32 %v1348, %v1451
    %v1453 = vpop.f32.mrb[0].mxu0
    %1454 = vmatprep.mubr.bf16.mxu0 0
    %1455 = vmatmul.mubr.bf16.gmra.mrb[0].mxu0 %v1379
    %v1456 = vpop.f32.mrb[0].mxu0
    %v1457 = vadd.f32 %v1348, %v1456
    %v1458 = vpop.f32.mrb[0].mxu0
    %v1459 = vpop.f32.mrb[0].mxu0
    %v1460 = vadd.f32 %v1348, %v1459
    %v1461 = vpop.f32.mrb[0].mxu0
    %1462 = vmatprep.mubr.bf16.mxu0 0
    %1463 = vmatmul.mubr.bf16.gmra.mrb[0].mxu0 %v1382
    %v1464 = vpop.f32.mrb[0].mxu0
    %v1465 = vadd.f32 %v1348, %v1464
    %v1466 = vpop.f32.mrb[0].mxu0
    %v1467 = vpop.f32.mrb[0].mxu0
    %v1468 = vadd.f32 %v1348, %v1467
    %v1469 = vpop.f32.mrb[0].mxu0
    %1470 = vmatprep.mubr.bf16.mxu0 0
    %1471 = vmatmul.mubr.bf16.gmra.mrb[0].mxu0 %v1385
    %v1472 = vpop.f32.mrb[0].mxu0
    %v1473 = vadd.f32 %v1348, %v1472
    %v1474 = vpop.f32.mrb[0].mxu0
    %v1475 = vpop.f32.mrb[0].mxu0
    %v1476 = vadd.f32 %v1348, %v1475
    %v1477 = vpop.f32.mrb[0].mxu0
    %1478 = vmatprep.mubr.bf16.mxu0 0
    %1479 = vmatmul.mubr.bf16.gmra.mrb[0].mxu0 %v1388
    %v1480 = vpop.f32.mrb[0].mxu0
    %v1481 = vadd.f32 %v1348, %v1480
    %v1482 = vpop.f32.mrb[0].mxu0
    %v1483 = vpop.f32.mrb[0].mxu0
    %v1484 = vadd.f32 %v1348, %v1483
    %v1485 = vpop.f32.mrb[0].mxu0
    %1486 = vmatprep.mubr.bf16.mxu0 0
    %1487 = vmatmul.mubr.bf16.gmra.mrb[0].mxu0 %v1391
    %v1488 = vpop.f32.mrb[0].mxu0
    %v1489 = vadd.f32 %v1348, %v1488
    %v1490 = vpop.f32.mrb[0].mxu0
    %v1491 = vpop.f32.mrb[0].mxu0
    %v1492 = vadd.f32 %v1348, %v1491
    %v1493 = vpop.f32.mrb[0].mxu0
    %1494 = vmatprep.mubr.bf16.mxu0 0
    %1495 = vmatmul.mubr.bf16.gmra.mrb[0].mxu0 %v1394
    %v1496 = vpop.f32.mrb[0].mxu0
    %v1497 = vadd.f32 %v1348, %v1496
    %v1498 = vpop.f32.mrb[0].mxu0
    %v1499 = vpop.f32.mrb[0].mxu0
    %v1500 = vadd.f32 %v1348, %v1499
    %v1501 = vpop.f32.mrb[0].mxu0
    %1502 = vmatprep.mubr.bf16.mxu0 0
    %1503 = vmatmul.mubr.bf16.gmra.mrb[0].mxu0 %v1397
    %v1504 = vpop.f32.mrb[0].mxu0
    %v1505 = vadd.f32 %v1348, %v1504
    %v1506 = vpop.f32.mrb[0].mxu0
    %v1507 = vpop.f32.mrb[0].mxu0
    %v1508 = vadd.f32 %v1348, %v1507
    %v1509 = vpop.f32.mrb[0].mxu0
    %1510 = vmatprep.mubr.bf16.mxu0 0
    %1511 = vmatmul.mubr.bf16.gmra.mrb[0].mxu0 %v1400
    %v1512 = vpop.f32.mrb[0].mxu0
    %v1513 = vadd.f32 %v1348, %v1512
    %v1514 = vpop.f32.mrb[0].mxu0
    %v1515 = vpop.f32.mrb[0].mxu0
    %v1516 = vadd.f32 %v1348, %v1515
    %v1517 = vpop.f32.mrb[0].mxu0
    %1518 = vmatprep.mubr.bf16.mxu0 0
    %1519 = vmatmul.mubr.bf16.gmra.mrb[0].mxu0 %v1403
    %v1520 = vpop.f32.mrb[0].mxu0
    %v1521 = vadd.f32 %v1348, %v1520
    %v1522 = vpop.f32.mrb[0].mxu0
    %v1523 = vpop.f32.mrb[0].mxu0
    %v1524 = vadd.f32 %v1348, %v1523
    %v1525 = vpop.f32.mrb[0].mxu0
    %1526 = vmatprep.mubr.bf16.mxu0 0
    %1527 = vmatmul.mubr.bf16.gmra.mrb[0].mxu0 %v1406
    %v1528 = vpop.f32.mrb[0].mxu0
    %v1529 = vadd.f32 %v1348, %v1528
    %v1530 = vpop.f32.mrb[0].mxu0
    %v1531 = vpop.f32.mrb[0].mxu0
    %v1532 = vadd.f32 %v1348, %v1531
    %v1533 = vpop.f32.mrb[0].mxu0
    %1534 = vmatprep.mubr.bf16.mxu0 0
    %1535 = vmatmul.mubr.bf16.gmra.mrb[0].mxu0 %v1409
    %v1536 = vpop.f32.mrb[0].mxu0
    %v1537 = vadd.f32 %v1348, %v1536
    %v1538 = vpop.f32.mrb[0].mxu0
    %v1539 = vpop.f32.mrb[0].mxu0
    %v1540 = vadd.f32 %v1348, %v1539
    %v1541 = vpop.f32.mrb[0].mxu0
    %1542 = vmatprep.mubr.bf16.mxu0 0
    %1543 = vmatmul.mubr.bf16.gmra.mrb[0].mxu0 %v1412
    %v1544 = vpop.f32.mrb[0].mxu0
    %v1545 = vadd.f32 %v1348, %v1544
    %v1546 = vpop.f32.mrb[0].mxu0
    %v1547 = vpop.f32.mrb[0].mxu0
    %v1548 = vpop.f32.mrb[0].mxu0
    %1549 = vdwg.mxu0
    %v1550 = vmax.f32 %v1449, 0.0
    %v1551 = vmax.f32 %v1452, 0.0
    %v1552 = vmax.f32 %v1457, 0.0
    %v1553 = vmax.f32 %v1460, 0.0
    %v1554 = vmax.f32 %v1465, 0.0
    %v1555 = vmax.f32 %v1468, 0.0
    %v1556 = vmax.f32 %v1473, 0.0
    %v1557 = vmax.f32 %v1476, 0.0
    %v1558 = vmax.f32 %v1481, 0.0
    %v1559 = vmax.f32 %v1484, 0.0
    %v1560 = vmax.f32 %v1489, 0.0
    %v1561 = vmax.f32 %v1492, 0.0
    %v1562 = vmax.f32 %v1497, 0.0
    %v1563 = vmax.f32 %v1500, 0.0
    %v1564 = vmax.f32 %v1505, 0.0
    %v1565 = vmax.f32 %v1508, 0.0
    %v1566 = vmax.f32 %v1513, 0.0
    %v1567 = vmax.f32 %v1516, 0.0
    %v1568 = vmax.f32 %v1521, 0.0
    %v1569 = vmax.f32 %v1524, 0.0
    %v1570 = vmax.f32 %v1529, 0.0
    %v1571 = vmax.f32 %v1532, 0.0
    %v1572 = vmax.f32 %v1537, 0.0
    %v1573 = vmax.f32 %v1540, 0.0
    %v1574 = vmax.f32 %v1545, 0.0
    %v1575 = vpack.c.bf16 %v1551, %v1550
    %v1576 = vpack.c.bf16 %v1553, %v1552
    %v1577 = vpack.c.bf16 %v1555, %v1554
    %v1578 = vpack.c.bf16 %v1557, %v1556
    %v1579 = vpack.c.bf16 %v1559, %v1558
    %v1580 = vpack.c.bf16 %v1561, %v1560
    %v1581 = vpack.c.bf16 %v1563, %v1562
    %v1582 = vpack.c.bf16 %v1565, %v1564
    %v1583 = vpack.c.bf16 %v1567, %v1566
    %v1584 = vpack.c.bf16 %v1569, %v1568
    %v1585 = vpack.c.bf16 %v1571, %v1570
    %v1586 = vpack.c.bf16 %v1573, %v1572
    %v1587 = vpack.c.bf16 %v1574, %v1574
    %v1588 = vld [vmem:[%s5] sm:$0xf]
    %v1589 = vld [vmem:[%s5 + $0x4] sm:$0xf]
    %v1590 = vld [vmem:[%s5 + $0x8] sm:$0xf]
    %v1591 = vld [vmem:[%s5 + $0xc] sm:$0xf]
    %v1592 = vld [vmem:[%s5 + $0x10] sm:$0xf]
    %v1593 = vld [vmem:[%s5 + $0x14] sm:$0xf]
    %v1594 = vld [vmem:[%s5 + $0x18] sm:$0xf]
    %v1595 = vld [vmem:[%s5 + $0x1c] sm:$0xf]
    %v1596 = vld [vmem:[%s6] sm:$0x1]
    %v1598 = vlaneseq
    %v1599 = vshrl.u32 %v1598, 7
    %v1600 = vsub.s32 0, %v1599
    %v1601 = vrot.slane %v1596, %v1600
    %v1611 = vunpack.c.l.b16 %v1588
    %v1612 = vunpack.c.l.b16 %v1589
    %v1613 = vunpack.c.l.b16 %v1590
    %v1614 = vunpack.c.l.b16 %v1591
    %v1615 = vunpack.c.l.b16 %v1592
    %v1616 = vunpack.c.l.b16 %v1593
    %v1617 = vunpack.c.l.b16 %v1594
    %v1618 = vunpack.c.l.b16 %v1595
    %v1619 = vpack.c.b16 %v1612, %v1611
    %v1620 = vpack.c.b16 %v1614, %v1613
    %v1621 = vpack.c.b16 %v1616, %v1615
    %v1622 = vpack.c.b16 %v1618, %v1617
    %v1628 = vsel %vm1374, %v1575, 0
    %v1631 = vsel %vm1374, %v1576, 0
    %v1634 = vsel %vm1374, %v1577, 0
    %v1637 = vsel %vm1374, %v1578, 0
    %v1640 = vsel %vm1374, %v1579, 0
    %v1643 = vsel %vm1374, %v1580, 0
    %v1646 = vsel %vm1374, %v1581, 0
    %v1649 = vsel %vm1374, %v1582, 0
    %v1652 = vsel %vm1374, %v1583, 0
    %v1655 = vsel %vm1374, %v1584, 0
    %v1658 = vsel %vm1374, %v1585, 0
    %v1661 = vsel %vm1374, %v1586, 0
    %v1664 = vsel %vm1374, %v1587, 0
    %1666 = vmatprep.subr.bf16.mxu0 0
    %1667 = vmatpush1.bf16.msra.mxu0 %v1619
    %1668 = vmatprep.subr.bf16.mxu0 0
    %1669 = vmatpush1.bf16.msra.mxu0 %v1620
    %1670 = vmatprep.subr.bf16.mxu0 0
    %1671 = vmatpush1.bf16.msra.mxu0 %v1621
    %1672 = vmatprep.subr.bf16.mxu0 0
    %1673 = vmatpush1.bf16.msra.mxu0 %v1622
    %1674 = vmatprep.subr.bf16.mxu0 0
    %1675 = vmatpush1.bf16.msra.mxu0 0
    %1676 = vmatprep.subr.bf16.mxu0 0
    %1677 = vmatpush1.bf16.msra.mxu0 0
    %1678 = vmatprep.subr.bf16.mxu0 0
    %1679 = vmatpush1.bf16.msra.mxu0 0
    %1680 = vmatprep.subr.bf16.mxu0 0
    %1681 = vmatpush1.bf16.msra.mxu0 0
    %1682 = vmatprep.subr.bf16.mxu0 0
    %1683 = vmatpush1.bf16.msra.mxu0 0
    %1684 = vmatprep.subr.bf16.mxu0 0
    %1685 = vmatpush1.bf16.msra.mxu0 0
    %1686 = vmatprep.subr.bf16.mxu0 0
    %1687 = vmatpush1.bf16.msra.mxu0 0
    %1688 = vmatprep.subr.bf16.mxu0 0
    %1689 = vmatpush1.bf16.msra.mxu0 0
    %1690 = vmatprep.subr.bf16.mxu0 0
    %1691 = vmatpush1.bf16.msra.mxu0 0
    %1692 = vmatprep.subr.bf16.mxu0 0
    %1693 = vmatpush1.bf16.msra.mxu0 0
    %1694 = vmatprep.subr.bf16.mxu0 0
    %1695 = vmatpush1.bf16.msra.mxu0 0
    %1696 = vmatprep.subr.bf16.mxu0 0
    %1697 = vmatpush1.bf16.msra.mxu0 0
    %1698 = vmatprep.mubr.bf16.mxu0 0
    %1699 = vmatmul.mubr.bf16.gmra.mrb[0].mxu0 %v1628
    %v1700 = vpop.f32.mrb[0].mxu0
    %v1701 = vadd.f32 %v1601, %v1700
    %v1702 = vpop.f32.mrb[0].mxu0
    %v1703 = vpop.f32.mrb[0].mxu0
    %v1704 = vadd.f32 %v1601, %v1703
    %v1705 = vpop.f32.mrb[0].mxu0
    %1706 = vmatprep.mubr.bf16.mxu0 0
    %1707 = vmatmul.mubr.bf16.gmra.mrb[0].mxu0 %v1631
    %v1708 = vpop.f32.mrb[0].mxu0
    %v1709 = vadd.f32 %v1601, %v1708
    %v1710 = vpop.f32.mrb[0].mxu0
    %v1711 = vpop.f32.mrb[0].mxu0
    %v1712 = vadd.f32 %v1601, %v1711
    %v1713 = vpop.f32.mrb[0].mxu0
    %1714 = vmatprep.mubr.bf16.mxu0 0
    %1715 = vmatmul.mubr.bf16.gmra.mrb[0].mxu0 %v1634
    %v1716 = vpop.f32.mrb[0].mxu0
    %v1717 = vadd.f32 %v1601, %v1716
    %v1718 = vpop.f32.mrb[0].mxu0
    %v1719 = vpop.f32.mrb[0].mxu0
    %v1720 = vadd.f32 %v1601, %v1719
    %v1721 = vpop.f32.mrb[0].mxu0
    %1722 = vmatprep.mubr.bf16.mxu0 0
    %1723 = vmatmul.mubr.bf16.gmra.mrb[0].mxu0 %v1637
    %v1724 = vpop.f32.mrb[0].mxu0
    %v1725 = vadd.f32 %v1601, %v1724
    %v1726 = vpop.f32.mrb[0].mxu0
    %v1727 = vpop.f32.mrb[0].mxu0
    %v1728 = vadd.f32 %v1601, %v1727
    %v1729 = vpop.f32.mrb[0].mxu0
    %1730 = vmatprep.mubr.bf16.mxu0 0
    %1731 = vmatmul.mubr.bf16.gmra.mrb[0].mxu0 %v1640
    %v1732 = vpop.f32.mrb[0].mxu0
    %v1733 = vadd.f32 %v1601, %v1732
    %v1734 = vpop.f32.mrb[0].mxu0
    %v1735 = vpop.f32.mrb[0].mxu0
    %v1736 = vadd.f32 %v1601, %v1735
    %v1737 = vpop.f32.mrb[0].mxu0
    %1738 = vmatprep.mubr.bf16.mxu0 0
    %1739 = vmatmul.mubr.bf16.gmra.mrb[0].mxu0 %v1643
    %v1740 = vpop.f32.mrb[0].mxu0
    %v1741 = vadd.f32 %v1601, %v1740
    %v1742 = vpop.f32.mrb[0].mxu0
    %v1743 = vpop.f32.mrb[0].mxu0
    %v1744 = vadd.f32 %v1601, %v1743
    %v1745 = vpop.f32.mrb[0].mxu0
    %1746 = vmatprep.mubr.bf16.mxu0 0
    %1747 = vmatmul.mubr.bf16.gmra.mrb[0].mxu0 %v1646
    %v1748 = vpop.f32.mrb[0].mxu0
    %v1749 = vadd.f32 %v1601, %v1748
    %v1750 = vpop.f32.mrb[0].mxu0
    %v1751 = vpop.f32.mrb[0].mxu0
    %v1752 = vadd.f32 %v1601, %v1751
    %v1753 = vpop.f32.mrb[0].mxu0
    %1754 = vmatprep.mubr.bf16.mxu0 0
    %1755 = vmatmul.mubr.bf16.gmra.mrb[0].mxu0 %v1649
    %v1756 = vpop.f32.mrb[0].mxu0
    %v1757 = vadd.f32 %v1601, %v1756
    %v1758 = vpop.f32.mrb[0].mxu0
    %v1759 = vpop.f32.mrb[0].mxu0
    %v1760 = vadd.f32 %v1601, %v1759
    %v1761 = vpop.f32.mrb[0].mxu0
    %1762 = vmatprep.mubr.bf16.mxu0 0
    %1763 = vmatmul.mubr.bf16.gmra.mrb[0].mxu0 %v1652
    %v1764 = vpop.f32.mrb[0].mxu0
    %v1765 = vadd.f32 %v1601, %v1764
    %v1766 = vpop.f32.mrb[0].mxu0
    %v1767 = vpop.f32.mrb[0].mxu0
    %v1768 = vadd.f32 %v1601, %v1767
    %v1769 = vpop.f32.mrb[0].mxu0
    %1770 = vmatprep.mubr.bf16.mxu0 0
    %1771 = vmatmul.mubr.bf16.gmra.mrb[0].mxu0 %v1655
    %v1772 = vpop.f32.mrb[0].mxu0
    %v1773 = vadd.f32 %v1601, %v1772
    %v1774 = vpop.f32.mrb[0].mxu0
    %v1775 = vpop.f32.mrb[0].mxu0
    %v1776 = vadd.f32 %v1601, %v1775
    %v1777 = vpop.f32.mrb[0].mxu0
    %1778 = vmatprep.mubr.bf16.mxu0 0
    %1779 = vmatmul.mubr.bf16.gmra.mrb[0].mxu0 %v1658
    %v1780 = vpop.f32.mrb[0].mxu0
    %v1781 = vadd.f32 %v1601, %v1780
    %v1782 = vpop.f32.mrb[0].mxu0
    %v1783 = vpop.f32.mrb[0].mxu0
    %v1784 = vadd.f32 %v1601, %v1783
    %v1785 = vpop.f32.mrb[0].mxu0
    %1786 = vmatprep.mubr.bf16.mxu0 0
    %1787 = vmatmul.mubr.bf16.gmra.mrb[0].mxu0 %v1661
    %v1788 = vpop.f32.mrb[0].mxu0
    %v1789 = vadd.f32 %v1601, %v1788
    %v1790 = vpop.f32.mrb[0].mxu0
    %v1791 = vpop.f32.mrb[0].mxu0
    %v1792 = vadd.f32 %v1601, %v1791
    %v1793 = vpop.f32.mrb[0].mxu0
    %1794 = vmatprep.mubr.bf16.mxu0 0
    %1795 = vmatmul.mubr.bf16.gmra.mrb[0].mxu0 %v1664
    %v1796 = vpop.f32.mrb[0].mxu0
    %v1797 = vadd.f32 %v1601, %v1796
    %v1798 = vpop.f32.mrb[0].mxu0
    %v1799 = vpop.f32.mrb[0].mxu0
    %v1800 = vpop.f32.mrb[0].mxu0
    %1801 = vdwg.mxu0
    %v1802 = vmax.f32 %v1701, 0.0
    %v1803 = vmax.f32 %v1704, 0.0
    %v1804 = vmax.f32 %v1709, 0.0
    %v1805 = vmax.f32 %v1712, 0.0
    %v1806 = vmax.f32 %v1717, 0.0
    %v1807 = vmax.f32 %v1720, 0.0
    %v1808 = vmax.f32 %v1725, 0.0
    %v1809 = vmax.f32 %v1728, 0.0
    %v1810 = vmax.f32 %v1733, 0.0
    %v1811 = vmax.f32 %v1736, 0.0
    %v1812 = vmax.f32 %v1741, 0.0
    %v1813 = vmax.f32 %v1744, 0.0
    %v1814 = vmax.f32 %v1749, 0.0
    %v1815 = vmax.f32 %v1752, 0.0
    %v1816 = vmax.f32 %v1757, 0.0
    %v1817 = vmax.f32 %v1760, 0.0
    %v1818 = vmax.f32 %v1765, 0.0
    %v1819 = vmax.f32 %v1768, 0.0
    %v1820 = vmax.f32 %v1773, 0.0
    %v1821 = vmax.f32 %v1776, 0.0
    %v1822 = vmax.f32 %v1781, 0.0
    %v1823 = vmax.f32 %v1784, 0.0
    %v1824 = vmax.f32 %v1789, 0.0
    %v1825 = vmax.f32 %v1792, 0.0
    %v1826 = vmax.f32 %v1797, 0.0
    %v1827 = vpack.c.bf16 %v1803, %v1802
    %v1828 = vpack.c.bf16 %v1805, %v1804
    %v1829 = vpack.c.bf16 %v1807, %v1806
    %v1830 = vpack.c.bf16 %v1809, %v1808
    %v1831 = vpack.c.bf16 %v1811, %v1810
    %v1832 = vpack.c.bf16 %v1813, %v1812
    %v1833 = vpack.c.bf16 %v1815, %v1814
    %v1834 = vpack.c.bf16 %v1817, %v1816
    %v1835 = vpack.c.bf16 %v1819, %v1818
    %v1836 = vpack.c.bf16 %v1821, %v1820
    %v1837 = vpack.c.bf16 %v1823, %v1822
    %v1838 = vpack.c.bf16 %v1825, %v1824
    %v1839 = vpack.c.bf16 %v1826, %v1826
    %v1840 = vld [vmem:[%s7] sm:$0xf]
    %v1841 = vld [vmem:[%s7 + $0x4] sm:$0xf]
    %v1842 = vld [vmem:[%s7 + $0x8] sm:$0xf]
    %v1843 = vld [vmem:[%s7 + $0xc] sm:$0xf]
    %v1844 = vld [vmem:[%s7 + $0x10] sm:$0xf]
    %v1845 = vld [vmem:[%s7 + $0x14] sm:$0xf]
    %v1846 = vld [vmem:[%s7 + $0x18] sm:$0xf]
    %v1847 = vld [vmem:[%s7 + $0x1c] sm:$0xf]
    %v1848 = vld [vmem:[%s8] sm:$0x1]
    %v1850 = vlaneseq
    %v1851 = vshrl.u32 %v1850, 7
    %v1852 = vsub.s32 0, %v1851
    %v1853 = vrot.slane %v1848, %v1852
    %v1863 = vunpack.c.l.b16 %v1840
    %v1864 = vunpack.c.l.b16 %v1841
    %v1865 = vunpack.c.l.b16 %v1842
    %v1866 = vunpack.c.l.b16 %v1843
    %v1867 = vunpack.c.l.b16 %v1844
    %v1868 = vunpack.c.l.b16 %v1845
    %v1869 = vunpack.c.l.b16 %v1846
    %v1870 = vunpack.c.l.b16 %v1847
    %v1871 = vpack.c.b16 %v1864, %v1863
    %v1872 = vpack.c.b16 %v1866, %v1865
    %v1873 = vpack.c.b16 %v1868, %v1867
    %v1874 = vpack.c.b16 %v1870, %v1869
    %v1880 = vsel %vm1374, %v1827, 0
    %v1883 = vsel %vm1374, %v1828, 0
    %v1886 = vsel %vm1374, %v1829, 0
    %v1889 = vsel %vm1374, %v1830, 0
    %v1892 = vsel %vm1374, %v1831, 0
    %v1895 = vsel %vm1374, %v1832, 0
    %v1898 = vsel %vm1374, %v1833, 0
    %v1901 = vsel %vm1374, %v1834, 0
    %v1904 = vsel %vm1374, %v1835, 0
    %v1907 = vsel %vm1374, %v1836, 0
    %v1910 = vsel %vm1374, %v1837, 0
    %v1913 = vsel %vm1374, %v1838, 0
    %v1916 = vsel %vm1374, %v1839, 0
    %1918 = vmatprep.subr.bf16.mxu0 0
    %1919 = vmatpush1.bf16.msra.mxu0 %v1871
    %1920 = vmatprep.subr.bf16.mxu0 0
    %1921 = vmatpush1.bf16.msra.mxu0 %v1872
    %1922 = vmatprep.subr.bf16.mxu0 0
    %1923 = vmatpush1.bf16.msra.mxu0 %v1873
    %1924 = vmatprep.subr.bf16.mxu0 0
    %1925 = vmatpush1.bf16.msra.mxu0 %v1874
    %1926 = vmatprep.subr.bf16.mxu0 0
    %1927 = vmatpush1.bf16.msra.mxu0 0
    %1928 = vmatprep.subr.bf16.mxu0 0
    %1929 = vmatpush1.bf16.msra.mxu0 0
    %1930 = vmatprep.subr.bf16.mxu0 0
    %1931 = vmatpush1.bf16.msra.mxu0 0
    %1932 = vmatprep.subr.bf16.mxu0 0
    %1933 = vmatpush1.bf16.msra.mxu0 0
    %1934 = vmatprep.subr.bf16.mxu0 0
    %1935 = vmatpush1.bf16.msra.mxu0 0
    %1936 = vmatprep.subr.bf16.mxu0 0
    %1937 = vmatpush1.bf16.msra.mxu0 0
    %1938 = vmatprep.subr.bf16.mxu0 0
    %1939 = vmatpush1.bf16.msra.mxu0 0
    %1940 = vmatprep.subr.bf16.mxu0 0
    %1941 = vmatpush1.bf16.msra.mxu0 0
    %1942 = vmatprep.subr.bf16.mxu0 0
    %1943 = vmatpush1.bf16.msra.mxu0 0
    %1944 = vmatprep.subr.bf16.mxu0 0
    %1945 = vmatpush1.bf16.msra.mxu0 0
    %1946 = vmatprep.subr.bf16.mxu0 0
    %1947 = vmatpush1.bf16.msra.mxu0 0
    %1948 = vmatprep.subr.bf16.mxu0 0
    %1949 = vmatpush1.bf16.msra.mxu0 0
    %1950 = vmatprep.mubr.bf16.mxu0 0
    %1951 = vmatmul.mubr.bf16.gmra.mrb[0].mxu0 %v1880
    %v1952 = vpop.f32.mrb[0].mxu0
    %v1953 = vadd.f32 %v1853, %v1952
    %v1954 = vpop.f32.mrb[0].mxu0
    %v1955 = vpop.f32.mrb[0].mxu0
    %v1956 = vadd.f32 %v1853, %v1955
    %v1957 = vpop.f32.mrb[0].mxu0
    %1958 = vmatprep.mubr.bf16.mxu0 0
    %1959 = vmatmul.mubr.bf16.gmra.mrb[0].mxu0 %v1883
    %v1960 = vpop.f32.mrb[0].mxu0
    %v1961 = vadd.f32 %v1853, %v1960
    %v1962 = vpop.f32.mrb[0].mxu0
    %v1963 = vpop.f32.mrb[0].mxu0
    %v1964 = vadd.f32 %v1853, %v1963
    %v1965 = vpop.f32.mrb[0].mxu0
    %1966 = vmatprep.mubr.bf16.mxu0 0
    %1967 = vmatmul.mubr.bf16.gmra.mrb[0].mxu0 %v1886
    %v1968 = vpop.f32.mrb[0].mxu0
    %v1969 = vadd.f32 %v1853, %v1968
    %v1970 = vpop.f32.mrb[0].mxu0
    %v1971 = vpop.f32.mrb[0].mxu0
    %v1972 = vadd.f32 %v1853, %v1971
    %v1973 = vpop.f32.mrb[0].mxu0
    %1974 = vmatprep.mubr.bf16.mxu0 0
    %1975 = vmatmul.mubr.bf16.gmra.mrb[0].mxu0 %v1889
    %v1976 = vpop.f32.mrb[0].mxu0
    %v1977 = vadd.f32 %v1853, %v1976
    %v1978 = vpop.f32.mrb[0].mxu0
    %v1979 = vpop.f32.mrb[0].mxu0
    %v1980 = vadd.f32 %v1853, %v1979
    %v1981 = vpop.f32.mrb[0].mxu0
    %1982 = vmatprep.mubr.bf16.mxu0 0
    %1983 = vmatmul.mubr.bf16.gmra.mrb[0].mxu0 %v1892
    %v1984 = vpop.f32.mrb[0].mxu0
    %v1985 = vadd.f32 %v1853, %v1984
    %v1986 = vpop.f32.mrb[0].mxu0
    %v1987 = vpop.f32.mrb[0].mxu0
    %v1988 = vadd.f32 %v1853, %v1987
    %v1989 = vpop.f32.mrb[0].mxu0
    %1990 = vmatprep.mubr.bf16.mxu0 0
    %1991 = vmatmul.mubr.bf16.gmra.mrb[0].mxu0 %v1895
    %v1992 = vpop.f32.mrb[0].mxu0
    %v1993 = vadd.f32 %v1853, %v1992
    %v1994 = vpop.f32.mrb[0].mxu0
    %v1995 = vpop.f32.mrb[0].mxu0
    %v1996 = vadd.f32 %v1853, %v1995
    %v1997 = vpop.f32.mrb[0].mxu0
    %1998 = vmatprep.mubr.bf16.mxu0 0
    %1999 = vmatmul.mubr.bf16.gmra.mrb[0].mxu0 %v1898
    %v2000 = vpop.f32.mrb[0].mxu0
    %v2001 = vadd.f32 %v1853, %v2000
    %v2002 = vpop.f32.mrb[0].mxu0
    %v2003 = vpop.f32.mrb[0].mxu0
    %v2004 = vadd.f32 %v1853, %v2003
    %v2005 = vpop.f32.mrb[0].mxu0
    %2006 = vmatprep.mubr.bf16.mxu0 0
    %2007 = vmatmul.mubr.bf16.gmra.mrb[0].mxu0 %v1901
    %v2008 = vpop.f32.mrb[0].mxu0
    %v2009 = vadd.f32 %v1853, %v2008
    %v2010 = vpop.f32.mrb[0].mxu0
    %v2011 = vpop.f32.mrb[0].mxu0
    %v2012 = vadd.f32 %v1853, %v2011
    %v2013 = vpop.f32.mrb[0].mxu0
    %2014 = vmatprep.mubr.bf16.mxu0 0
    %2015 = vmatmul.mubr.bf16.gmra.mrb[0].mxu0 %v1904
    %v2016 = vpop.f32.mrb[0].mxu0
    %v2017 = vadd.f32 %v1853, %v2016
    %v2018 = vpop.f32.mrb[0].mxu0
    %v2019 = vpop.f32.mrb[0].mxu0
    %v2020 = vadd.f32 %v1853, %v2019
    %v2021 = vpop.f32.mrb[0].mxu0
    %2022 = vmatprep.mubr.bf16.mxu0 0
    %2023 = vmatmul.mubr.bf16.gmra.mrb[0].mxu0 %v1907
    %v2024 = vpop.f32.mrb[0].mxu0
    %v2025 = vadd.f32 %v1853, %v2024
    %v2026 = vpop.f32.mrb[0].mxu0
    %v2027 = vpop.f32.mrb[0].mxu0
    %v2028 = vadd.f32 %v1853, %v2027
    %v2029 = vpop.f32.mrb[0].mxu0
    %2030 = vmatprep.mubr.bf16.mxu0 0
    %2031 = vmatmul.mubr.bf16.gmra.mrb[0].mxu0 %v1910
    %v2032 = vpop.f32.mrb[0].mxu0
    %v2033 = vadd.f32 %v1853, %v2032
    %v2034 = vpop.f32.mrb[0].mxu0
    %v2035 = vpop.f32.mrb[0].mxu0
    %v2036 = vadd.f32 %v1853, %v2035
    %v2037 = vpop.f32.mrb[0].mxu0
    %2038 = vmatprep.mubr.bf16.mxu0 0
    %2039 = vmatmul.mubr.bf16.gmra.mrb[0].mxu0 %v1913
    %v2040 = vpop.f32.mrb[0].mxu0
    %v2041 = vadd.f32 %v1853, %v2040
    %v2042 = vpop.f32.mrb[0].mxu0
    %v2043 = vpop.f32.mrb[0].mxu0
    %v2044 = vadd.f32 %v1853, %v2043
    %v2045 = vpop.f32.mrb[0].mxu0
    %2046 = vmatprep.mubr.bf16.mxu0 0
    %2047 = vmatmul.mubr.bf16.gmra.mrb[0].mxu0 %v1916
    %v2048 = vpop.f32.mrb[0].mxu0
    %v2049 = vadd.f32 %v1853, %v2048
    %v2050 = vpop.f32.mrb[0].mxu0
    %v2051 = vpop.f32.mrb[0].mxu0
    %v2052 = vpop.f32.mrb[0].mxu0
    %2053 = vdwg.mxu0
    %2054 = vmax.xlane.f32.xlu0 %v1953
    %v2055 = vpop.xlane.xlu0 %2054
    %2056 = vmax.xlane.f32.xlu0 %v1956
    %v2057 = vpop.xlane.xlu0 %2056
    %2058 = vmax.xlane.f32.xlu0 %v1961
    %v2059 = vpop.xlane.xlu0 %2058
    %2060 = vmax.xlane.f32.xlu0 %v1964
    %v2061 = vpop.xlane.xlu0 %2060
    %2062 = vmax.xlane.f32.xlu0 %v1969
    %v2063 = vpop.xlane.xlu0 %2062
    %2064 = vmax.xlane.f32.xlu0 %v1972
    %v2065 = vpop.xlane.xlu0 %2064
    %2066 = vmax.xlane.f32.xlu0 %v1977
    %v2067 = vpop.xlane.xlu0 %2066
    %2068 = vmax.xlane.f32.xlu0 %v1980
    %v2069 = vpop.xlane.xlu0 %2068
    %2070 = vmax.xlane.f32.xlu0 %v1985
    %v2071 = vpop.xlane.xlu0 %2070
    %2072 = vmax.xlane.f32.xlu0 %v1988
    %v2073 = vpop.xlane.xlu0 %2072
    %2074 = vmax.xlane.f32.xlu0 %v1993
    %v2075 = vpop.xlane.xlu0 %2074
    %2076 = vmax.xlane.f32.xlu0 %v1996
    %v2077 = vpop.xlane.xlu0 %2076
    %2078 = vmax.xlane.f32.xlu0 %v2001
    %v2079 = vpop.xlane.xlu0 %2078
    %2080 = vmax.xlane.f32.xlu0 %v2004
    %v2081 = vpop.xlane.xlu0 %2080
    %2082 = vmax.xlane.f32.xlu0 %v2009
    %v2083 = vpop.xlane.xlu0 %2082
    %2084 = vmax.xlane.f32.xlu0 %v2012
    %v2085 = vpop.xlane.xlu0 %2084
    %2086 = vmax.xlane.f32.xlu0 %v2017
    %v2087 = vpop.xlane.xlu0 %2086
    %2088 = vmax.xlane.f32.xlu0 %v2020
    %v2089 = vpop.xlane.xlu0 %2088
    %2090 = vmax.xlane.f32.xlu0 %v2025
    %v2091 = vpop.xlane.xlu0 %2090
    %2092 = vmax.xlane.f32.xlu0 %v2028
    %v2093 = vpop.xlane.xlu0 %2092
    %2094 = vmax.xlane.f32.xlu0 %v2033
    %v2095 = vpop.xlane.xlu0 %2094
    %2096 = vmax.xlane.f32.xlu0 %v2036
    %v2097 = vpop.xlane.xlu0 %2096
    %2098 = vmax.xlane.f32.xlu0 %v2041
    %v2099 = vpop.xlane.xlu0 %2098
    %2100 = vmax.xlane.f32.xlu0 %v2044
    %v2101 = vpop.xlane.xlu0 %2100
    %2102 = vmax.xlane.f32.xlu0 %v2049
    %v2103 = vpop.xlane.xlu0 %2102
    %v2104 = vsub.f32 %v1953, %v2055
    %v2105 = vsub.f32 %v1956, %v2057
    %v2106 = vsub.f32 %v1961, %v2059
    %v2107 = vsub.f32 %v1964, %v2061
    %v2108 = vsub.f32 %v1969, %v2063
    %v2109 = vsub.f32 %v1972, %v2065
    %v2110 = vsub.f32 %v1977, %v2067
    %v2111 = vsub.f32 %v1980, %v2069
    %v2112 = vsub.f32 %v1985, %v2071
    %v2113 = vsub.f32 %v1988, %v2073
    %v2114 = vsub.f32 %v1993, %v2075
    %v2115 = vsub.f32 %v1996, %v2077
    %v2116 = vsub.f32 %v2001, %v2079
    %v2117 = vsub.f32 %v2004, %v2081
    %v2118 = vsub.f32 %v2009, %v2083
    %v2119 = vsub.f32 %v2012, %v2085
    %v2120 = vsub.f32 %v2017, %v2087
    %v2121 = vsub.f32 %v2020, %v2089
    %v2122 = vsub.f32 %v2025, %v2091
    %v2123 = vsub.f32 %v2028, %v2093
    %v2124 = vsub.f32 %v2033, %v2095
    %v2125 = vsub.f32 %v2036, %v2097
    %v2126 = vsub.f32 %v2041, %v2099
    %v2127 = vsub.f32 %v2044, %v2101
    %v2128 = vsub.f32 %v2049, %v2103
    %v2129 = vmul.f32 %v2104, 1.442695
    %v2130 = vpow.pop %v2129
    %v2131 = vmul.f32 %v2105, 1.442695
    %v2132 = vpow.pop %v2131
    %v2133 = vmul.f32 %v2106, 1.442695
    %v2134 = vpow.pop %v2133
    %v2135 = vmul.f32 %v2107, 1.442695
    %v2136 = vpow.pop %v2135
    %v2137 = vmul.f32 %v2108, 1.442695
    %v2138 = vpow.pop %v2137
    %v2139 = vmul.f32 %v2109, 1.442695
    %v2140 = vpow.pop %v2139
    %v2141 = vmul.f32 %v2110, 1.442695
    %v2142 = vpow.pop %v2141
    %v2143 = vmul.f32 %v2111, 1.442695
    %v2144 = vpow.pop %v2143
    %v2145 = vmul.f32 %v2112, 1.442695
    %v2146 = vpow.pop %v2145
    %v2147 = vmul.f32 %v2113, 1.442695
    %v2148 = vpow.pop %v2147
    %v2149 = vmul.f32 %v2114, 1.442695
    %v2150 = vpow.pop %v2149
    %v2151 = vmul.f32 %v2115, 1.442695
    %v2152 = vpow.pop %v2151
    %v2153 = vmul.f32 %v2116, 1.442695
    %v2154 = vpow.pop %v2153
    %v2155 = vmul.f32 %v2117, 1.442695
    %v2156 = vpow.pop %v2155
    %v2157 = vmul.f32 %v2118, 1.442695
    %v2158 = vpow.pop %v2157
    %v2159 = vmul.f32 %v2119, 1.442695
    %v2160 = vpow.pop %v2159
    %v2161 = vmul.f32 %v2120, 1.442695
    %v2162 = vpow.pop %v2161
    %v2163 = vmul.f32 %v2121, 1.442695
    %v2164 = vpow.pop %v2163
    %v2165 = vmul.f32 %v2122, 1.442695
    %v2166 = vpow.pop %v2165
    %v2167 = vmul.f32 %v2123, 1.442695
    %v2168 = vpow.pop %v2167
    %v2169 = vmul.f32 %v2124, 1.442695
    %v2170 = vpow.pop %v2169
    %v2171 = vmul.f32 %v2125, 1.442695
    %v2172 = vpow.pop %v2171
    %v2173 = vmul.f32 %v2126, 1.442695
    %v2174 = vpow.pop %v2173
    %v2175 = vmul.f32 %v2127, 1.442695
    %v2176 = vpow.pop %v2175
    %v2177 = vmul.f32 %v2128, 1.442695
    %v2178 = vpow.pop %v2177
    %2179 = vadd.xlane.f32.xlu0 %v2130
    %v2180 = vpop.xlane.xlu0 %2179
    %2181 = vadd.xlane.f32.xlu0 %v2132
    %v2182 = vpop.xlane.xlu0 %2181
    %2183 = vadd.xlane.f32.xlu0 %v2134
    %v2184 = vpop.xlane.xlu0 %2183
    %2185 = vadd.xlane.f32.xlu0 %v2136
    %v2186 = vpop.xlane.xlu0 %2185
    %2187 = vadd.xlane.f32.xlu0 %v2138
    %v2188 = vpop.xlane.xlu0 %2187
    %2189 = vadd.xlane.f32.xlu0 %v2140
    %v2190 = vpop.xlane.xlu0 %2189
    %2191 = vadd.xlane.f32.xlu0 %v2142
    %v2192 = vpop.xlane.xlu0 %2191
    %2193 = vadd.xlane.f32.xlu0 %v2144
    %v2194 = vpop.xlane.xlu0 %2193
    %2195 = vadd.xlane.f32.xlu0 %v2146
    %v2196 = vpop.xlane.xlu0 %2195
    %2197 = vadd.xlane.f32.xlu0 %v2148
    %v2198 = vpop.xlane.xlu0 %2197
    %2199 = vadd.xlane.f32.xlu0 %v2150
    %v2200 = vpop.xlane.xlu0 %2199
    %2201 = vadd.xlane.f32.xlu0 %v2152
    %v2202 = vpop.xlane.xlu0 %2201
    %2203 = vadd.xlane.f32.xlu0 %v2154
    %v2204 = vpop.xlane.xlu0 %2203
    %2205 = vadd.xlane.f32.xlu0 %v2156
    %v2206 = vpop.xlane.xlu0 %2205
    %2207 = vadd.xlane.f32.xlu0 %v2158
    %v2208 = vpop.xlane.xlu0 %2207
    %2209 = vadd.xlane.f32.xlu0 %v2160
    %v2210 = vpop.xlane.xlu0 %2209
    %2211 = vadd.xlane.f32.xlu0 %v2162
    %v2212 = vpop.xlane.xlu0 %2211
    %2213 = vadd.xlane.f32.xlu0 %v2164
    %v2214 = vpop.xlane.xlu0 %2213
    %2215 = vadd.xlane.f32.xlu0 %v2166
    %v2216 = vpop.xlane.xlu0 %2215
    %2217 = vadd.xlane.f32.xlu0 %v2168
    %v2218 = vpop.xlane.xlu0 %2217
    %2219 = vadd.xlane.f32.xlu0 %v2170
    %v2220 = vpop.xlane.xlu0 %2219
    %2221 = vadd.xlane.f32.xlu0 %v2172
    %v2222 = vpop.xlane.xlu0 %2221
    %2223 = vadd.xlane.f32.xlu0 %v2174
    %v2224 = vpop.xlane.xlu0 %2223
    %2225 = vadd.xlane.f32.xlu0 %v2176
    %v2226 = vpop.xlane.xlu0 %2225
    %2227 = vadd.xlane.f32.xlu0 %v2178
    %v2228 = vpop.xlane.xlu0 %2227
    %v2229 = vlog2.pop %v2180
    %v2230 = vmul.f32 %v2229, 0.6931472
    %v2231 = vlog2.pop %v2182
    %v2232 = vmul.f32 %v2231, 0.6931472
    %v2233 = vlog2.pop %v2184
    %v2234 = vmul.f32 %v2233, 0.6931472
    %v2235 = vlog2.pop %v2186
    %v2236 = vmul.f32 %v2235, 0.6931472
    %v2237 = vlog2.pop %v2188
    %v2238 = vmul.f32 %v2237, 0.6931472
    %v2239 = vlog2.pop %v2190
    %v2240 = vmul.f32 %v2239, 0.6931472
    %v2241 = vlog2.pop %v2192
    %v2242 = vmul.f32 %v2241, 0.6931472
    %v2243 = vlog2.pop %v2194
    %v2244 = vmul.f32 %v2243, 0.6931472
    %v2245 = vlog2.pop %v2196
    %v2246 = vmul.f32 %v2245, 0.6931472
    %v2247 = vlog2.pop %v2198
    %v2248 = vmul.f32 %v2247, 0.6931472
    %v2249 = vlog2.pop %v2200
    %v2250 = vmul.f32 %v2249, 0.6931472
    %v2251 = vlog2.pop %v2202
    %v2252 = vmul.f32 %v2251, 0.6931472
    %v2253 = vlog2.pop %v2204
    %v2254 = vmul.f32 %v2253, 0.6931472
    %v2255 = vlog2.pop %v2206
    %v2256 = vmul.f32 %v2255, 0.6931472
    %v2257 = vlog2.pop %v2208
    %v2258 = vmul.f32 %v2257, 0.6931472
    %v2259 = vlog2.pop %v2210
    %v2260 = vmul.f32 %v2259, 0.6931472
    %v2261 = vlog2.pop %v2212
    %v2262 = vmul.f32 %v2261, 0.6931472
    %v2263 = vlog2.pop %v2214
    %v2264 = vmul.f32 %v2263, 0.6931472
    %v2265 = vlog2.pop %v2216
    %v2266 = vmul.f32 %v2265, 0.6931472
    %v2267 = vlog2.pop %v2218
    %v2268 = vmul.f32 %v2267, 0.6931472
    %v2269 = vlog2.pop %v2220
    %v2270 = vmul.f32 %v2269, 0.6931472
    %v2271 = vlog2.pop %v2222
    %v2272 = vmul.f32 %v2271, 0.6931472
    %v2273 = vlog2.pop %v2224
    %v2274 = vmul.f32 %v2273, 0.6931472
    %v2275 = vlog2.pop %v2226
    %v2276 = vmul.f32 %v2275, 0.6931472
    %v2277 = vlog2.pop %v2228
    %v2278 = vmul.f32 %v2277, 0.6931472
    %v2279 = vsub.f32 %v2104, %v2230
    %v2280 = vsub.f32 %v2105, %v2232
    %v2281 = vsub.f32 %v2106, %v2234
    %v2282 = vsub.f32 %v2107, %v2236
    %v2283 = vsub.f32 %v2108, %v2238
    %v2284 = vsub.f32 %v2109, %v2240
    %v2285 = vsub.f32 %v2110, %v2242
    %v2286 = vsub.f32 %v2111, %v2244
    %v2287 = vsub.f32 %v2112, %v2246
    %v2288 = vsub.f32 %v2113, %v2248
    %v2289 = vsub.f32 %v2114, %v2250
    %v2290 = vsub.f32 %v2115, %v2252
    %v2291 = vsub.f32 %v2116, %v2254
    %v2292 = vsub.f32 %v2117, %v2256
    %v2293 = vsub.f32 %v2118, %v2258
    %v2294 = vsub.f32 %v2119, %v2260
    %v2295 = vsub.f32 %v2120, %v2262
    %v2296 = vsub.f32 %v2121, %v2264
    %v2297 = vsub.f32 %v2122, %v2266
    %v2298 = vsub.f32 %v2123, %v2268
    %v2299 = vsub.f32 %v2124, %v2270
    %v2300 = vsub.f32 %v2125, %v2272
    %v2301 = vsub.f32 %v2126, %v2274
    %v2302 = vsub.f32 %v2127, %v2276
    %v2303 = vsub.f32 %v2128, %v2278
    %2304 = vst [vmem:[#allocation5] sm:$0xff] %v2279
    %2305 = vst [vmem:[#allocation5 + $0x8] sm:$0xff] %v2280
    %2306 = vst [vmem:[#allocation5 + $0x10] sm:$0xff] %v2281
    %2307 = vst [vmem:[#allocation5 + $0x18] sm:$0xff] %v2282
    %2308 = vst [vmem:[#allocation5 + $0x20] sm:$0xff] %v2283
    %2309 = vst [vmem:[#allocation5 + $0x28] sm:$0xff] %v2284
    %2310 = vst [vmem:[#allocation5 + $0x30] sm:$0xff] %v2285
    %2311 = vst [vmem:[#allocation5 + $0x38] sm:$0xff] %v2286
    %2312 = vst [vmem:[#allocation5 + $0x40] sm:$0xff] %v2287
    %2313 = vst [vmem:[#allocation5 + $0x48] sm:$0xff] %v2288
    %2314 = vst [vmem:[#allocation5 + $0x50] sm:$0xff] %v2289
    %2315 = vst [vmem:[#allocation5 + $0x58] sm:$0xff] %v2290
    %2316 = vst [vmem:[#allocation5 + $0x60] sm:$0xff] %v2291
    %2317 = vst [vmem:[#allocation5 + $0x68] sm:$0xff] %v2292
    %2318 = vst [vmem:[#allocation5 + $0x70] sm:$0xff] %v2293
    %2319 = vst [vmem:[#allocation5 + $0x78] sm:$0xff] %v2294
    %2320 = vst [vmem:[#allocation5 + $0x80] sm:$0xff] %v2295
    %2321 = vst [vmem:[#allocation5 + $0x88] sm:$0xff] %v2296
    %2322 = vst [vmem:[#allocation5 + $0x90] sm:$0xff] %v2297
    %2323 = vst [vmem:[#allocation5 + $0x98] sm:$0xff] %v2298
    %2324 = vst [vmem:[#allocation5 + $0xa0] sm:$0xff] %v2299
    %2325 = vst [vmem:[#allocation5 + $0xa8] sm:$0xff] %v2300
    %2326 = vst [vmem:[#allocation5 + $0xb0] sm:$0xff] %v2301
    %2327 = vst [vmem:[#allocation5 + $0xb8] sm:$0xff] %v2302
    %2328 = vst [vmem:[#allocation5 + $0xc0] sm:$0xff] %v2303
    // Predicated region
    $region42: #{tpu_custom_call.1} parent=1 // pred_check
      _
    $region43: #{tpu_custom_call.1} parent=1 // pred_check_branch
      %2330 = sbr.rel (0) target = $region45
    $region44: #{tpu_custom_call.1} parent=1 // pred_region
      %s2332 = ssub.s32 3200, 3200
      %2333 = vsyncadd [#allocation4], %s2332
      %s2334 = sshll.u32 [#allocation5], 4
      %s2335 = int_to_ptr.vmem [resolvable:$true] %s2334
      %2340 = dma.vmem_to_hbm [thread:$0]  %s2335, 3200, %s9, [#allocation4], 128, 128, 8
    $region45: #{tpu_custom_call.1} parent=1 // pred_fallthru
      _
    // Predicated region
    $region46: #{tpu_custom_call.1} parent=1 // pred_check
      _
    $region47: #{tpu_custom_call.1} parent=1 // pred_check_branch
      %2342 = sbr.rel (0) target = $region49
    $region48: #{tpu_custom_call.1} parent=1 // pred_region
      %2343 = dma.done [#allocation4], 3200
    $region49: #{tpu_custom_call.1} parent=1 // pred_fallthru
      _
    %2344 = vsyncpa [#allocation3], 1
    %2345 = vsyncpa [#allocation4], 1

</llo_original>
